<compile_context>
chip_gen: v7x
topology: tpu7x:2x2x1
jax: 0.10.0
libtpu: 0.0.40
codegen_flags: <defaults>
</compile_context>

<pallas_src>
import jax
import jax.numpy as jnp
import numpy as np
from jax import lax
from jax.experimental import pallas as pl
from jax.experimental.pallas import tpu as pltpu

N_EMBD = 384
BLOCK_SIZE = 256   # max sequence length of the module's causal mask
_LANE = 128


def _pick_batch_block(batch, max_bb=8):
    """Largest divisor of `batch` <= max_bb, preferring >= 2 grid steps (v7x)."""
    divisors = [d for d in range(1, max_bb + 1) if batch % d == 0]
    multi = [d for d in divisors if batch // d >= 2]
    return max(multi) if multi else max(divisors)


def pack_qkv_weights(wq, wk, wv, dtype=jnp.bfloat16):
    """nn.Linear (hs, C) weights -> (C, 3*seg) bf16 slab; each segment padded to 128 lanes."""
    hs, _ = wq.shape
    seg = ((hs + _LANE - 1) // _LANE) * _LANE

    def prep(w):
        wt = w.T.astype(dtype)                    # (C, hs)
        if seg != hs:
            wt = jnp.pad(wt, ((0, 0), (0, seg - hs)))
        return wt                                  # (C, seg)

    return jnp.concatenate([prep(wq), prep(wk), prep(wv)], axis=1)   # (C, 3*seg)


# ---------------------------------------------------------------------------
# Fused kernel: Bb batch rows per grid step.
#   x_ref    : (Bb, T, C)        activation tile (f32 in HBM, cast to bf16 here)
#   wqkv_ref : (C, 3*seg)        stacked, pre-transposed, lane-padded [Wq|Wk|Wv] bf16
#   o_ref    : (Bb, T, hs)       head output (f32)
# ---------------------------------------------------------------------------
def _head_kernel(x_ref, wqkv_ref, o_ref):
    Bb, T, C = x_ref.shape
    hs = o_ref.shape[-1]
    seg = wqkv_ref.shape[-1] // 3
    scale = float(hs) ** -0.5        # PyTorch scales by head_size**-0.5

    # Fused QKV projection: one MXU call, M = Bb*T, N = 3*seg (lane-dense).
    x = x_ref[...].reshape(Bb * T, C).astype(jnp.bfloat16)
    qkv = jnp.dot(x, wqkv_ref[...],
                  preferred_element_type=jnp.float32)              # (Bb*T, 3*seg) f32

    # 128-lane-aligned slices (no relayout); bf16 operands for attention matmuls.
    q = qkv[:, 0 * seg:1 * seg].reshape(Bb, T, seg).astype(jnp.bfloat16)
    k = qkv[:, 1 * seg:2 * seg].reshape(Bb, T, seg).astype(jnp.bfloat16)
    v = qkv[:, 2 * seg:3 * seg].reshape(Bb, T, seg).astype(jnp.bfloat16)

    # Scores (zero-padded lanes of q/k contribute nothing), f32 accumulation.
    wei = jnp.einsum('bqd,bkd->bqk', q, k,
                     preferred_element_type=jnp.float32) * scale   # (Bb, T, T)

    # Causal mask; the diagonal is always unmasked so -inf is safe.
    row = lax.broadcasted_iota(jnp.int32, (T, T), 0)
    col = lax.broadcasted_iota(jnp.int32, (T, T), 1)
    wei = jnp.where((col <= row)[None, :, :], wei, -jnp.inf)

    # Un-normalized softmax in f32; normalize AFTER p@v via EUP reciprocal.
    wei = wei - jnp.max(wei, axis=-1, keepdims=True)
    p = jnp.exp(wei)
    l = jnp.sum(p, axis=-1, keepdims=True)                          # (Bb, T, 1)

    out = jnp.einsum('bqk,bkd->bqd', p.astype(jnp.bfloat16), v,
                     preferred_element_type=jnp.float32)            # (Bb, T, seg)
    out = out * pl.reciprocal(l, approx=True)

    # Drop the zero-padded value lanes and store.
    o_ref[...] = out[:, :, :hs].astype(o_ref.dtype)


def head_attention(x, wqkv_packed, head_size):
    """x: (B, T, C) f32; wqkv_packed: (C, 3*seg) bf16 from pack_qkv_weights()."""
    B, T, C = x.shape
    assert C == N_EMBD and T <= BLOCK_SIZE and T % 8 == 0
    hs = head_size
    seg3 = wqkv_packed.shape[-1]
    Bb = _pick_batch_block(B)

    flops = 2 * B * T * C * 3 * hs + 2 * B * T * T * hs + 2 * B * T * T * hs
    bytes_accessed = (x.size * x.dtype.itemsize
                      + wqkv_packed.size * wqkv_packed.dtype.itemsize
                      + B * T * hs * 4)

    return pl.pallas_call(
        _head_kernel,
        out_shape=jax.ShapeDtypeStruct((B, T, hs), jnp.float32),
        grid_spec=pltpu.PrefetchScalarGridSpec(
            num_scalar_prefetch=0,
            grid=(B // Bb,),
            in_specs=[
                pl.BlockSpec((Bb, T, C), lambda b: (b, 0, 0)),
                # Constant index_map -> fetched once, resident in VMEM.
                pl.BlockSpec((C, seg3), lambda b: (0, 0)),
            ],
            out_specs=pl.BlockSpec((Bb, T, hs), lambda b: (b, 0, 0)),
        ),
        compiler_params=pltpu.CompilerParams(
            dimension_semantics=("parallel",)),
        cost_estimate=pl.CostEstimate(
            flops=flops, transcendentals=B * T * T,
            bytes_accessed=bytes_accessed),
    )(x, wqkv_packed)


def head_attention_from_linear(x, wq, wk, wv):
    """Convenience wrapper: pack nn.Linear weights, then run the fused kernel."""
    return head_attention(x, pack_qkv_weights(wq, wk, wv), head_size=wq.shape[0])


# ---------------------------------------------------------------------------
# Pure-JAX f32 reference (mirrors PyTorch Head.forward, eval mode).
# ---------------------------------------------------------------------------
def reference(x, wq, wk, wv):
    B, T, C = x.shape
    hs = wq.shape[0]
    q = x @ wq.T
    k = x @ wk.T
    v = x @ wv.T
    wei = (q @ jnp.swapaxes(k, -2, -1)) * (hs ** -0.5)
    mask = jnp.tril(jnp.ones((T, T), dtype=bool))
    wei = jnp.where(mask, wei, -jnp.inf)
    wei = jax.nn.softmax(wei, axis=-1)
    return wei @ v


if __name__ == "__main__":
    # Small shapes consistent with the module: C must equal N_EMBD = 384,
    # T <= BLOCK_SIZE.  head_size = 64 (the usual N_EMBD / n_heads choice).
    B, T, hs = 4, 128, 64

    key = jax.random.PRNGKey(0)
    kx, kq, kk, kv = jax.random.split(key, 4)

    x = jax.random.normal(kx, (B, T, N_EMBD), dtype=jnp.float32)

    # Deterministic nn.Linear-style init (uniform +/- 1/sqrt(fan_in)).
    lim = 1.0 / np.sqrt(N_EMBD)
    wq = jax.random.uniform(kq, (hs, N_EMBD), jnp.float32, -lim, lim)
    wk = jax.random.uniform(kk, (hs, N_EMBD), jnp.float32, -lim, lim)
    wv = jax.random.uniform(kv, (hs, N_EMBD), jnp.float32, -lim, lim)

    # Pack (concat + transpose + pad + bf16) once, outside the kernel call.
    wqkv = pack_qkv_weights(wq, wk, wv)

    out = jax.block_until_ready(head_attention(x, wqkv, head_size=hs))
    ref = jax.block_until_ready(reference(x, wq, wk, wv))

    # bf16 MXU operands + approx reciprocal -> ~1e-2 relative error vs f32 ref.
    np.testing.assert_allclose(np.asarray(out), np.asarray(ref),
                               atol=5e-2, rtol=5e-2)
    print("KERNEL_OK")
</pallas_src>

<mosaic_0001>
module attributes {stable_mosaic.version = 11 : i64} {
  func.func @_head_kernel(%arg0: i32, %arg1: memref<2x128x384xf32, #tpu.memory_space<vmem>>, %arg2: memref<384x384xbf16, #tpu.memory_space<vmem>>, %arg3: memref<2x128x64xf32, #tpu.memory_space<vmem>>) attributes {dimension_semantics = [#tpu.dimension_semantics<parallel>], iteration_bounds = array<i64: 2>, scalar_prefetch = 0 : i64, scratch_operands = 0 : i64, tpu.core_type = #tpu.core_type<tc>, window_params = [{transform_indices = @transform_0, window_bounds = array<i64: 2, 128, 384>}, {pipeline_mode = #tpu.pipeline_mode<synchronous>, transform_indices = @transform_1, window_bounds = array<i64: 384, 384>}, {transform_indices = @transform_2, window_bounds = array<i64: 2, 128, 64>}]} {
    %c0 = arith.constant 0 : index
    %c0_0 = arith.constant 0 : index
    %c0_1 = arith.constant 0 : index
    %0 = vector.load %arg1[%c0, %c0_0, %c0_1] : memref<2x128x384xf32, #tpu.memory_space<vmem>>, vector<2x128x384xf32>
    %1 = vector.shape_cast %0 : vector<2x128x384xf32> to vector<256x384xf32>
    %2 = arith.truncf %1 : vector<256x384xf32> to vector<256x384xbf16>
    %c0_2 = arith.constant 0 : index
    %c0_3 = arith.constant 0 : index
    %3 = vector.load %arg2[%c0_2, %c0_3] : memref<384x384xbf16, #tpu.memory_space<vmem>>, vector<384x384xbf16>
    %cst = arith.constant dense<0.000000e+00> : vector<256x384xf32>
    %4 = tpu.matmul %2, %3, %cst {dimension_numbers = #tpu.dot_dimension_numbers<[1], [0], [0], [1], [0, 0, 1, 1], [], []>} : vector<256x384xbf16>, vector<384x384xbf16>, vector<256x384xf32> -> vector<256x384xf32>
    %5 = vector.extract_strided_slice %4 {offsets = [0, 0], sizes = [256, 128], strides = [1, 1]} : vector<256x384xf32> to vector<256x128xf32>
    %6 = vector.shape_cast %5 : vector<256x128xf32> to vector<2x128x128xf32>
    %7 = arith.truncf %6 : vector<2x128x128xf32> to vector<2x128x128xbf16>
    %8 = vector.extract_strided_slice %4 {offsets = [0, 128], sizes = [256, 128], strides = [1, 1]} : vector<256x384xf32> to vector<256x128xf32>
    %9 = vector.shape_cast %8 : vector<256x128xf32> to vector<2x128x128xf32>
    %10 = arith.truncf %9 : vector<2x128x128xf32> to vector<2x128x128xbf16>
    %11 = vector.extract_strided_slice %4 {offsets = [0, 256], sizes = [256, 128], strides = [1, 1]} : vector<256x384xf32> to vector<256x128xf32>
    %12 = vector.shape_cast %11 : vector<256x128xf32> to vector<2x128x128xf32>
    %13 = arith.truncf %12 : vector<2x128x128xf32> to vector<2x128x128xbf16>
    "tpu.trace_start"() <{level = 10 : i32, message = "bqd,bkd->bqk"}> : () -> ()
    %cst_4 = arith.constant dense<0.000000e+00> : vector<2x128x128xf32>
    %14 = tpu.matmul %7, %10, %cst_4 {dimension_numbers = #tpu.dot_dimension_numbers<[2], [2], [1], [1], [0, 0, 0, 1, 1, 1], [0], [0]>} : vector<2x128x128xbf16>, vector<2x128x128xbf16>, vector<2x128x128xf32> -> vector<2x128x128xf32>
    "tpu.trace_stop"() : () -> ()
    %cst_5 = arith.constant 1.250000e-01 : f32
    %15 = vector.broadcast %cst_5 : f32 to vector<2x128x128xf32>
    %16 = arith.mulf %14, %15 : vector<2x128x128xf32>
    %17 = tpu.iota {dimensions = array<i32: 0>} : vector<128x128xi32>
    %18 = tpu.iota {dimensions = array<i32: 1>} : vector<128x128xi32>
    %19 = arith.cmpi sle, %18, %17 : vector<128x128xi32>
    %20 = vector.shape_cast %19 : vector<128x128xi1> to vector<1x128x128xi1>
    %cst_6 = arith.constant 0xFF800000 : f32
    %21 = vector.shape_cast %20 : vector<1x128x128xi1> to vector<1x128x128xi1>
    %22 = vector.broadcast %21 : vector<1x128x128xi1> to vector<2x128x128xi1>
    %23 = vector.broadcast %cst_6 : f32 to vector<2x128x128xf32>
    %24 = arith.select %22, %16, %23 : vector<2x128x128xi1>, vector<2x128x128xf32>
    %cst_7 = arith.constant dense<0xFF800000> : vector<2x128xf32>
    %25 = vector.multi_reduction <maximumf>, %24, %cst_7 [2] : vector<2x128x128xf32> to vector<2x128xf32>
    %26 = vector.shape_cast %25 : vector<2x128xf32> to vector<2x128x1xf32>
    %27 = vector.broadcast %26 : vector<2x128x1xf32> to vector<2x128x128xf32>
    %28 = arith.subf %24, %27 : vector<2x128x128xf32>
    %29 = math.exp %28 : vector<2x128x128xf32>
    %cst_8 = arith.constant dense<0.000000e+00> : vector<2x128xf32>
    %30 = vector.multi_reduction <add>, %29, %cst_8 [2] : vector<2x128x128xf32> to vector<2x128xf32>
    %31 = vector.shape_cast %30 : vector<2x128xf32> to vector<2x128x1xf32>
    %32 = arith.truncf %29 : vector<2x128x128xf32> to vector<2x128x128xbf16>
    "tpu.trace_start"() <{level = 10 : i32, message = "bqk,bkd->bqd"}> : () -> ()
    %cst_9 = arith.constant dense<0.000000e+00> : vector<2x128x128xf32>
    %33 = tpu.matmul %32, %13, %cst_9 {dimension_numbers = #tpu.dot_dimension_numbers<[2], [1], [1], [2], [0, 0, 0, 1, 1, 2], [0], [0]>} : vector<2x128x128xbf16>, vector<2x128x128xbf16>, vector<2x128x128xf32> -> vector<2x128x128xf32>
    "tpu.trace_stop"() : () -> ()
    %34 = tpu.reciprocal %31 {approx = true} : vector<2x128x1xf32> -> vector<2x128x1xf32>
    %35 = vector.broadcast %34 : vector<2x128x1xf32> to vector<2x128x128xf32>
    %36 = arith.mulf %33, %35 : vector<2x128x128xf32>
    %37 = vector.extract_strided_slice %36 {offsets = [0, 0, 0], sizes = [2, 128, 64], strides = [1, 1, 1]} : vector<2x128x128xf32> to vector<2x128x64xf32>
    %c0_10 = arith.constant 0 : index
    %c0_11 = arith.constant 0 : index
    %c0_12 = arith.constant 0 : index
    %38 = vector.load %arg3[%c0_10, %c0_11, %c0_12] : memref<2x128x64xf32, #tpu.memory_space<vmem>>, vector<2x128x64xf32>
    tpu.vector_store %arg3[%c0_10, %c0_11, %c0_12], %37 {strides = array<i32>} : memref<2x128x64xf32, #tpu.memory_space<vmem>>, vector<2x128x64xf32>,
    return
  }
  func.func @transform_0(%arg0: i32) -> (i32, i32, i32) {
    %c0_i32 = arith.constant 0 : i32
    %c0_i32_0 = arith.constant 0 : i32
    %c0_i32_1 = arith.constant 0 : i32
    return %arg0, %c0_i32, %c0_i32_0 : i32, i32, i32
  }
  func.func @transform_1(%arg0: i32) -> (i32, i32) {
    %c0_i32 = arith.constant 0 : i32
    %c0_i32_0 = arith.constant 0 : i32
    %c0_i32_1 = arith.constant 0 : i32
    return %c0_i32, %c0_i32_0 : i32, i32
  }
  func.func @transform_2(%arg0: i32) -> (i32, i32, i32) {
    %c0_i32 = arith.constant 0 : i32
    %c0_i32_0 = arith.constant 0 : i32
    %c0_i32_1 = arith.constant 0 : i32
    return %arg0, %c0_i32, %c0_i32_0 : i32, i32, i32
  }
}

</mosaic_0001>

<llo_original>
// kernel: tpu_custom_call.1
$region0: #{tpu_custom_call.1}
  #allocation0 [shape = 'u32[]', space=smem, size = 0x4, offset = 0x4, fixed_abs, tag = 'smem constant byte address 0x4 - core index']
  #allocation1 [shape = 'u32[144,128]{1,0:T(1,128)}', space=vmem, size = 0x12000, scoped, tag = 'internal scratch']
  %s0 = inlined_call_operand.hbm [shape: f32[4,128,384], index: 0, kind: input, shape index: {}]
  %s1 = inlined_call_operand.hbm [shape: bf16[384,384], index: 1, kind: input, shape index: {}]
  %s2 = inlined_call_operand.vmem [shape: f32[4,128,64], index: 2, kind: output, shape index: {}]
  %s3 = sld [smem:[#allocation0]]
  $region49: #{tpu_custom_call.1} parent=0
    _
  %s5 = ssub.s32 1, %s3
  %s6 = scalar_select 0, %s5, %s3
  $region1: #{tpu_custom_call.1} parent=0
    #allocation2 [shape = 'u8[786432]{0}', space=vmem, size = 0xc0000, scoped, tag = 'input window, operand 0']
    #allocation3 [shape = 's32[2]{0}', space=sflag, size = 0x8, scoped, tag = 'scoped memory for tpu_custom_call.1']
    #allocation4 [shape = 'u8[294912]{0}', space=vmem, size = 0x48000, scoped, tag = 'input window, operand 1, single buffered']
    #allocation5 [shape = 's32[1]{0}', space=sflag, size = 0x4, scoped, tag = 'scoped memory for tpu_custom_call.1']
    %7 = vsyncpa [#allocation3], 0
    %s8 = scalar_lea.sflag [#allocation3], 1
    %9 = vsyncpa %s8, 0
    %10 = vsyncpa [#allocation5], 0
    loop: start=0, step=1, limit=4
    $region2: #{tpu_custom_call.1} parent=1 // loop_pre_header
      _
    $region3: #{tpu_custom_call.1} parent=1 // loop_header
      %s12 = sphi 0, %s16
      %p13 = scmp.ge.s32.totalorder %s12, 4
      %s22 = sphi 0, %s24
      %s25 = sphi 0, %s22
      %s26 = sphi 0, %s25
      %s42 = sphi 0, %s26
      %s46 = sphi 0, %s46
      %s48 = sphi 0, %s46
      %s49 = sphi 0, %s48
      %s63 = sphi 0, %s49
      %s69 = sphi 0, %s71
      %s72 = sphi 0, %s69
      %s73 = sphi 0, %s72
      %s89 = sphi 0, %s73
    $region4: #{tpu_custom_call.1} parent=1 // loop_header_branch
      %15 = sbr.rel (%p13) target = $region8
    $region5: #{tpu_custom_call.1} parent=1 // loop_body
      %s17 = ssub.s32 %s12, 1
      %s18 = ssub.s32 %s12, 2
      %s19 = sadd.s32 %s12, 1
      %s20 = ssub.s32 %s12, %s19
      %p21 = scmp.eq.s32.totalorder %s20, 0
      %s23 = sadd.s32 %s22, 1
      %s24 = scalar_select %p21, %s22, %s23
      %p27 = pneg %p21
      %p28 = scmp.eq.s32.totalorder %s12, 1
      %p29 = por %p27, %p28
      %p30 = scmp.ne.s32.totalorder %s22, %s25
      %p31 = scmp.eq.s32.totalorder %s12, 0
      %p32 = por %p30, %p31
      %p33 = scmp.ne.s32.totalorder %s22, %s25
      %p34 = scmp.eq.s32.totalorder %s17, 1
      %p35 = por %p33, %p34
      %p36 = scmp.ne.s32.totalorder %s25, %s26
      %p37 = scmp.eq.s32.totalorder %s17, 0
      %p38 = por %p36, %p37
      %p39 = scmp.ne.s32.totalorder %s25, %s26
      %p40 = scmp.eq.s32.totalorder %s18, 1
      %p41 = por %p39, %p40
      %p43 = scmp.ne.s32.totalorder %s26, %s42
      %p44 = scmp.eq.s32.totalorder %s18, 0
      %p45 = por %p43, %p44
      %s47 = sadd.s32 %s46, 1
      %p50 = scmp.eq.s32.totalorder %s12, 1
      %p51 = scmp.ne.s32.totalorder %s46, %s48
      %p52 = scmp.eq.s32.totalorder %s12, 0
      %p53 = por %p51, %p52
      %p54 = scmp.ne.s32.totalorder %s46, %s48
      %p55 = scmp.eq.s32.totalorder %s17, 1
      %p56 = por %p54, %p55
      %p57 = scmp.ne.s32.totalorder %s48, %s49
      %p58 = scmp.eq.s32.totalorder %s17, 0
      %p59 = por %p57, %p58
      %p60 = scmp.ne.s32.totalorder %s48, %s49
      %p61 = scmp.eq.s32.totalorder %s18, 1
      %p62 = por %p60, %p61
      %p64 = scmp.ne.s32.totalorder %s49, %s63
      %p65 = scmp.eq.s32.totalorder %s18, 0
      %p66 = por %p64, %p65
      %s67 = ssub.s32 %s12, %s19
      %p68 = scmp.eq.s32.totalorder %s67, 0
      %s70 = sadd.s32 %s69, 1
      %s71 = scalar_select %p68, %s69, %s70
      %p74 = pneg %p68
      %p75 = scmp.eq.s32.totalorder %s12, 1
      %p76 = por %p74, %p75
      %p77 = scmp.ne.s32.totalorder %s69, %s72
      %p78 = scmp.eq.s32.totalorder %s12, 0
      %p79 = por %p77, %p78
      %p80 = scmp.ne.s32.totalorder %s69, %s72
      %p81 = scmp.eq.s32.totalorder %s17, 1
      %p82 = por %p80, %p81
      %p83 = scmp.ne.s32.totalorder %s72, %s73
      %p84 = scmp.eq.s32.totalorder %s17, 0
      %p85 = por %p83, %p84
      %p86 = scmp.ne.s32.totalorder %s72, %s73
      %p87 = scmp.eq.s32.totalorder %s18, 1
      %p88 = por %p86, %p87
      %p90 = scmp.ne.s32.totalorder %s73, %s89
      %p91 = scmp.eq.s32.totalorder %s18, 0
      %p92 = por %p90, %p91
      %p93 = scmp.le.s32.totalorder 1, %s12
      %p94 = scmp.lt.s32.totalorder %s12, 3
      %p95 = pnand %p93, %p94
      %p96 = pneg %p95
      // Predicated region
      $region9: #{tpu_custom_call.1} parent=5 // pred_check
        _
      $region10: #{tpu_custom_call.1} parent=5 // pred_check_branch
        %98 = sbr.rel (%p95) target = $region12
      $region11: #{tpu_custom_call.1} parent=5 // pred_region
        %s99 = ssub.s32 %s12, 1
        // Predicated region
        $region13: #{tpu_custom_call.1} parent=11 // pred_check
          %p100 = pneg %p59
        $region14: #{tpu_custom_call.1} parent=11 // pred_check_branch
          %102 = sbr.rel (%p100) target = $region16
        $region15: #{tpu_custom_call.1} parent=11 // pred_region
          %s104 = ssub.s32 9216, 9216
          %105 = vsyncadd [#allocation5], %s104
          %s106 = sshll.u32 [#allocation4], 4
          %s107 = int_to_ptr.vmem [resolvable:$true] %s106
          %112 = dma.hbm_to_vmem [thread:$0]  %s1, 9216, %s107, [#allocation5], 192, 192, 12
        $region16: #{tpu_custom_call.1} parent=11 // pred_fallthru
          _
      $region12: #{tpu_custom_call.1} parent=5 // pred_fallthru
        _
      %p113 = scmp.lt.s32.totalorder %s12, 2
      // Predicated region
      $region17: #{tpu_custom_call.1} parent=5 // pred_check
        %p114 = pneg %p113
      $region18: #{tpu_custom_call.1} parent=5 // pred_check_branch
        %116 = sbr.rel (%p114) target = $region20
      $region19: #{tpu_custom_call.1} parent=5 // pred_region
        // Predicated region
        $region21: #{tpu_custom_call.1} parent=19 // pred_check
          %p117 = pneg %p32
        $region22: #{tpu_custom_call.1} parent=19 // pred_check_branch
          %119 = sbr.rel (%p117) target = $region24
        $region23: #{tpu_custom_call.1} parent=19 // pred_region
          %s120 = sand.u32 %s22, 1
          %s121 = scalar_lea.sflag [#allocation3], %s120
          %s122 = sand.u32 %s22, 1
          %s123 = smul.addr %s122, 768
          %s124 = scalar_lea.vmem [#allocation2], %s123
          %s125 = smul.u32 2, %s12
          %s127 = ssub.s32 12288, 12288
          %128 = vsyncadd %s121, %s127
          %s129 = smul.addr %s125, 48
          %s130 = smul.addr %s129, 128
          %s131 = scalar_lea.hbm %s0, %s130
          %s132 = sshll.u32 %s124, 4
          %s133 = int_to_ptr.vmem [resolvable:$true] %s132
          %138 = dma.hbm_to_vmem [thread:$0]  %s131, 12288, %s133, %s121, 384, 384, 24
        $region24: #{tpu_custom_call.1} parent=19 // pred_fallthru
          _
      $region20: #{tpu_custom_call.1} parent=5 // pred_fallthru
        _
      %p139 = scmp.le.s32.totalorder 1, %s12
      %p140 = scmp.lt.s32.totalorder %s12, 3
      %p141 = pnand %p139, %p140
      %p142 = pneg %p141
      // Predicated region
      $region25: #{tpu_custom_call.1} parent=5 // pred_check
        _
      $region26: #{tpu_custom_call.1} parent=5 // pred_check_branch
        %144 = sbr.rel (%p141) target = $region28
      $region27: #{tpu_custom_call.1} parent=5 // pred_region
        %s145 = ssub.s32 %s12, 1
        %s146 = sand.u32 %s25, 1
        %s147 = scalar_lea.sflag [#allocation3], %s146
        %s148 = sand.u32 %s25, 1
        %s149 = smul.addr %s148, 768
        %s150 = scalar_lea.vmem [#allocation2], %s149
        // Predicated region
        $region29: #{tpu_custom_call.1} parent=27 // pred_check
          %p151 = pneg %p38
        $region30: #{tpu_custom_call.1} parent=27 // pred_check_branch
          %153 = sbr.rel (%p151) target = $region32
        $region31: #{tpu_custom_call.1} parent=27 // pred_region
          %154 = dma.done %s147, 12288
        $region32: #{tpu_custom_call.1} parent=27 // pred_fallthru
          _
        // Predicated region
        $region33: #{tpu_custom_call.1} parent=27 // pred_check
          %p155 = pneg %p59
        $region34: #{tpu_custom_call.1} parent=27 // pred_check_branch
          %157 = sbr.rel (%p155) target = $region36
        $region35: #{tpu_custom_call.1} parent=27 // pred_region
          %158 = dma.done [#allocation5], 9216
        $region36: #{tpu_custom_call.1} parent=27 // pred_fallthru
          _
        %s159 = sand.u32 %s25, 1
        %s160 = scalar_lea.sflag [#allocation3], %s159
        %s161 = sand.u32 %s25, 1
        %s162 = smul.addr %s161, 768
        %s163 = scalar_lea.vmem [#allocation2], %s162
        %p164 = pneg %p38
        %p165 = pneg %p35
        %p166 = pneg %p59
        %p167 = pneg %p56
        %p168 = pneg %p85
        %p169 = pneg %p82
        %s170 = smul.u32 2, %s17
        %p171 = scmp.lt.s32.totalorder %s170, 3
        %s172 = scalar_select %p171, %s170, 3
        %s173 = smul.addr %s172, 16
        %s174 = smul.addr %s173, 8
        %s175 = scalar_lea.vmem %s2, %s174
        %s176 = smul.u32 2, %s17
        %s177 = smul.u32 2, %s17
        %p178 = scmp.lt.s32.totalorder %s177, 3
        %s179 = scalar_select %p178, %s177, 3
        %s180 = smul.addr %s179, 16
        %s181 = smul.addr %s180, 8
        %s182 = scalar_lea.vmem %s2, %s181
        %s183 = smul.u32 2, %s17
        %v185 = vld [vmem:[%s150] sm:$0xff]
        %v186 = vld [vmem:[%s150 + $0x8] sm:$0xff]
        %v187 = vld [vmem:[%s150 + $0x10] sm:$0xff]
        %v188 = vld [vmem:[%s150 + $0x18] sm:$0xff]
        %v189 = vld [vmem:[%s150 + $0x20] sm:$0xff]
        %v190 = vld [vmem:[%s150 + $0x28] sm:$0xff]
        %v191 = vld [vmem:[%s150 + $0x30] sm:$0xff]
        %v192 = vld [vmem:[%s150 + $0x38] sm:$0xff]
        %v193 = vld [vmem:[%s150 + $0x40] sm:$0xff]
        %v194 = vld [vmem:[%s150 + $0x48] sm:$0xff]
        %v195 = vld [vmem:[%s150 + $0x50] sm:$0xff]
        %v196 = vld [vmem:[%s150 + $0x58] sm:$0xff]
        %v197 = vld [vmem:[%s150 + $0x60] sm:$0xff]
        %v198 = vld [vmem:[%s150 + $0x68] sm:$0xff]
        %v199 = vld [vmem:[%s150 + $0x70] sm:$0xff]
        %v200 = vld [vmem:[%s150 + $0x78] sm:$0xff]
        %v201 = vld [vmem:[%s150 + $0x80] sm:$0xff]
        %v202 = vld [vmem:[%s150 + $0x88] sm:$0xff]
        %v203 = vld [vmem:[%s150 + $0x90] sm:$0xff]
        %v204 = vld [vmem:[%s150 + $0x98] sm:$0xff]
        %v205 = vld [vmem:[%s150 + $0xa0] sm:$0xff]
        %v206 = vld [vmem:[%s150 + $0xa8] sm:$0xff]
        %v207 = vld [vmem:[%s150 + $0xb0] sm:$0xff]
        %v208 = vld [vmem:[%s150 + $0xb8] sm:$0xff]
        %v209 = vld [vmem:[%s150 + $0xc0] sm:$0xff]
        %v210 = vld [vmem:[%s150 + $0xc8] sm:$0xff]
        %v211 = vld [vmem:[%s150 + $0xd0] sm:$0xff]
        %v212 = vld [vmem:[%s150 + $0xd8] sm:$0xff]
        %v213 = vld [vmem:[%s150 + $0xe0] sm:$0xff]
        %v214 = vld [vmem:[%s150 + $0xe8] sm:$0xff]
        %v215 = vld [vmem:[%s150 + $0xf0] sm:$0xff]
        %v216 = vld [vmem:[%s150 + $0xf8] sm:$0xff]
        %v217 = vld [vmem:[%s150 + $0x100] sm:$0xff]
        %v218 = vld [vmem:[%s150 + $0x108] sm:$0xff]
        %v219 = vld [vmem:[%s150 + $0x110] sm:$0xff]
        %v220 = vld [vmem:[%s150 + $0x118] sm:$0xff]
        %v221 = vld [vmem:[%s150 + $0x120] sm:$0xff]
        %v222 = vld [vmem:[%s150 + $0x128] sm:$0xff]
        %v223 = vld [vmem:[%s150 + $0x130] sm:$0xff]
        %v224 = vld [vmem:[%s150 + $0x138] sm:$0xff]
        %v225 = vld [vmem:[%s150 + $0x140] sm:$0xff]
        %v226 = vld [vmem:[%s150 + $0x148] sm:$0xff]
        %v227 = vld [vmem:[%s150 + $0x150] sm:$0xff]
        %v228 = vld [vmem:[%s150 + $0x158] sm:$0xff]
        %v229 = vld [vmem:[%s150 + $0x160] sm:$0xff]
        %v230 = vld [vmem:[%s150 + $0x168] sm:$0xff]
        %v231 = vld [vmem:[%s150 + $0x170] sm:$0xff]
        %v232 = vld [vmem:[%s150 + $0x178] sm:$0xff]
        %v233 = vld [vmem:[%s150 + $0x180] sm:$0xff]
        %v234 = vld [vmem:[%s150 + $0x188] sm:$0xff]
        %v235 = vld [vmem:[%s150 + $0x190] sm:$0xff]
        %v236 = vld [vmem:[%s150 + $0x198] sm:$0xff]
        %v237 = vld [vmem:[%s150 + $0x1a0] sm:$0xff]
        %v238 = vld [vmem:[%s150 + $0x1a8] sm:$0xff]
        %v239 = vld [vmem:[%s150 + $0x1b0] sm:$0xff]
        %v240 = vld [vmem:[%s150 + $0x1b8] sm:$0xff]
        %v241 = vld [vmem:[%s150 + $0x1c0] sm:$0xff]
        %v242 = vld [vmem:[%s150 + $0x1c8] sm:$0xff]
        %v243 = vld [vmem:[%s150 + $0x1d0] sm:$0xff]
        %v244 = vld [vmem:[%s150 + $0x1d8] sm:$0xff]
        %v245 = vld [vmem:[%s150 + $0x1e0] sm:$0xff]
        %v246 = vld [vmem:[%s150 + $0x1e8] sm:$0xff]
        %v247 = vld [vmem:[%s150 + $0x1f0] sm:$0xff]
        %v248 = vld [vmem:[%s150 + $0x1f8] sm:$0xff]
        %v249 = vld [vmem:[%s150 + $0x200] sm:$0xff]
        %v250 = vld [vmem:[%s150 + $0x208] sm:$0xff]
        %v251 = vld [vmem:[%s150 + $0x210] sm:$0xff]
        %v252 = vld [vmem:[%s150 + $0x218] sm:$0xff]
        %v253 = vld [vmem:[%s150 + $0x220] sm:$0xff]
        %v254 = vld [vmem:[%s150 + $0x228] sm:$0xff]
        %v255 = vld [vmem:[%s150 + $0x230] sm:$0xff]
        %v256 = vld [vmem:[%s150 + $0x238] sm:$0xff]
        %v257 = vld [vmem:[%s150 + $0x240] sm:$0xff]
        %v258 = vld [vmem:[%s150 + $0x248] sm:$0xff]
        %v259 = vld [vmem:[%s150 + $0x250] sm:$0xff]
        %v260 = vld [vmem:[%s150 + $0x258] sm:$0xff]
        %v261 = vld [vmem:[%s150 + $0x260] sm:$0xff]
        %v262 = vld [vmem:[%s150 + $0x268] sm:$0xff]
        %v263 = vld [vmem:[%s150 + $0x270] sm:$0xff]
        %v264 = vld [vmem:[%s150 + $0x278] sm:$0xff]
        %v265 = vld [vmem:[%s150 + $0x280] sm:$0xff]
        %v266 = vld [vmem:[%s150 + $0x288] sm:$0xff]
        %v267 = vld [vmem:[%s150 + $0x290] sm:$0xff]
        %v268 = vld [vmem:[%s150 + $0x298] sm:$0xff]
        %v269 = vld [vmem:[%s150 + $0x2a0] sm:$0xff]
        %v270 = vld [vmem:[%s150 + $0x2a8] sm:$0xff]
        %v271 = vld [vmem:[%s150 + $0x2b0] sm:$0xff]
        %v272 = vld [vmem:[%s150 + $0x2b8] sm:$0xff]
        %v273 = vld [vmem:[%s150 + $0x2c0] sm:$0xff]
        %v274 = vld [vmem:[%s150 + $0x2c8] sm:$0xff]
        %v275 = vld [vmem:[%s150 + $0x2d0] sm:$0xff]
        %v276 = vld [vmem:[%s150 + $0x2d8] sm:$0xff]
        %v277 = vld [vmem:[%s150 + $0x2e0] sm:$0xff]
        %v278 = vld [vmem:[%s150 + $0x2e8] sm:$0xff]
        %v279 = vld [vmem:[%s150 + $0x2f0] sm:$0xff]
        %v280 = vld [vmem:[%s150 + $0x2f8] sm:$0xff]
        %v281 = vpack.c.bf16 %v188, %v185
        %v282 = vpack.c.bf16 %v189, %v186
        %v283 = vpack.c.bf16 %v190, %v187
        %v284 = vpack.c.bf16 %v194, %v191
        %v285 = vpack.c.bf16 %v195, %v192
        %v286 = vpack.c.bf16 %v196, %v193
        %v287 = vpack.c.bf16 %v200, %v197
        %v288 = vpack.c.bf16 %v201, %v198
        %v289 = vpack.c.bf16 %v202, %v199
        %v290 = vpack.c.bf16 %v206, %v203
        %v291 = vpack.c.bf16 %v207, %v204
        %v292 = vpack.c.bf16 %v208, %v205
        %v293 = vpack.c.bf16 %v212, %v209
        %v294 = vpack.c.bf16 %v213, %v210
        %v295 = vpack.c.bf16 %v214, %v211
        %v296 = vpack.c.bf16 %v218, %v215
        %v297 = vpack.c.bf16 %v219, %v216
        %v298 = vpack.c.bf16 %v220, %v217
        %v299 = vpack.c.bf16 %v224, %v221
        %v300 = vpack.c.bf16 %v225, %v222
        %v301 = vpack.c.bf16 %v226, %v223
        %v302 = vpack.c.bf16 %v230, %v227
        %v303 = vpack.c.bf16 %v231, %v228
        %v304 = vpack.c.bf16 %v232, %v229
        %v305 = vpack.c.bf16 %v236, %v233
        %v306 = vpack.c.bf16 %v237, %v234
        %v307 = vpack.c.bf16 %v238, %v235
        %v308 = vpack.c.bf16 %v242, %v239
        %v309 = vpack.c.bf16 %v243, %v240
        %v310 = vpack.c.bf16 %v244, %v241
        %v311 = vpack.c.bf16 %v248, %v245
        %v312 = vpack.c.bf16 %v249, %v246
        %v313 = vpack.c.bf16 %v250, %v247
        %v314 = vpack.c.bf16 %v254, %v251
        %v315 = vpack.c.bf16 %v255, %v252
        %v316 = vpack.c.bf16 %v256, %v253
        %v317 = vpack.c.bf16 %v260, %v257
        %v318 = vpack.c.bf16 %v261, %v258
        %v319 = vpack.c.bf16 %v262, %v259
        %v320 = vpack.c.bf16 %v266, %v263
        %v321 = vpack.c.bf16 %v267, %v264
        %v322 = vpack.c.bf16 %v268, %v265
        %v323 = vpack.c.bf16 %v272, %v269
        %v324 = vpack.c.bf16 %v273, %v270
        %v325 = vpack.c.bf16 %v274, %v271
        %v326 = vpack.c.bf16 %v278, %v275
        %v327 = vpack.c.bf16 %v279, %v276
        %v328 = vpack.c.bf16 %v280, %v277
        %v329 = vld [vmem:[#allocation4] sm:$0xff]
        %v330 = vld [vmem:[#allocation4 + $0x8] sm:$0xf]
        %v331 = vld [vmem:[#allocation4 + $0xc] sm:$0xff]
        %v332 = vld [vmem:[#allocation4 + $0x14] sm:$0xf]
        %v333 = vld [vmem:[#allocation4 + $0x18] sm:$0xff]
        %v334 = vld [vmem:[#allocation4 + $0x20] sm:$0xf]
        %v335 = vld [vmem:[#allocation4 + $0x24] sm:$0xff]
        %v336 = vld [vmem:[#allocation4 + $0x2c] sm:$0xf]
        %v337 = vld [vmem:[#allocation4 + $0x30] sm:$0xff]
        %v338 = vld [vmem:[#allocation4 + $0x38] sm:$0xf]
        %v339 = vld [vmem:[#allocation4 + $0x3c] sm:$0xff]
        %v340 = vld [vmem:[#allocation4 + $0x44] sm:$0xf]
        %v341 = vld [vmem:[#allocation4 + $0x48] sm:$0xff]
        %v342 = vld [vmem:[#allocation4 + $0x50] sm:$0xf]
        %v343 = vld [vmem:[#allocation4 + $0x54] sm:$0xff]
        %v344 = vld [vmem:[#allocation4 + $0x5c] sm:$0xf]
        %v345 = vld [vmem:[#allocation4 + $0x60] sm:$0xff]
        %v346 = vld [vmem:[#allocation4 + $0x68] sm:$0xf]
        %v347 = vld [vmem:[#allocation4 + $0x6c] sm:$0xff]
        %v348 = vld [vmem:[#allocation4 + $0x74] sm:$0xf]
        %v349 = vld [vmem:[#allocation4 + $0x78] sm:$0xff]
        %v350 = vld [vmem:[#allocation4 + $0x80] sm:$0xf]
        %v351 = vld [vmem:[#allocation4 + $0x84] sm:$0xff]
        %v352 = vld [vmem:[#allocation4 + $0x8c] sm:$0xf]
        %v353 = vld [vmem:[#allocation4 + $0x90] sm:$0xff]
        %v354 = vld [vmem:[#allocation4 + $0x98] sm:$0xf]
        %v355 = vld [vmem:[#allocation4 + $0x9c] sm:$0xff]
        %v356 = vld [vmem:[#allocation4 + $0xa4] sm:$0xf]
        %v357 = vld [vmem:[#allocation4 + $0xa8] sm:$0xff]
        %v358 = vld [vmem:[#allocation4 + $0xb0] sm:$0xf]
        %v359 = vld [vmem:[#allocation4 + $0xb4] sm:$0xff]
        %v360 = vld [vmem:[#allocation4 + $0xbc] sm:$0xf]
        %v361 = vld [vmem:[#allocation4 + $0xc0] sm:$0xff]
        %v362 = vld [vmem:[#allocation4 + $0xc8] sm:$0xf]
        %v363 = vld [vmem:[#allocation4 + $0xcc] sm:$0xff]
        %v364 = vld [vmem:[#allocation4 + $0xd4] sm:$0xf]
        %v365 = vld [vmem:[#allocation4 + $0xd8] sm:$0xff]
        %v366 = vld [vmem:[#allocation4 + $0xe0] sm:$0xf]
        %v367 = vld [vmem:[#allocation4 + $0xe4] sm:$0xff]
        %v368 = vld [vmem:[#allocation4 + $0xec] sm:$0xf]
        %v369 = vld [vmem:[#allocation4 + $0xf0] sm:$0xff]
        %v370 = vld [vmem:[#allocation4 + $0xf8] sm:$0xf]
        %v371 = vld [vmem:[#allocation4 + $0xfc] sm:$0xff]
        %v372 = vld [vmem:[#allocation4 + $0x104] sm:$0xf]
        %v373 = vld [vmem:[#allocation4 + $0x108] sm:$0xff]
        %v374 = vld [vmem:[#allocation4 + $0x110] sm:$0xf]
        %v375 = vld [vmem:[#allocation4 + $0x114] sm:$0xff]
        %v376 = vld [vmem:[#allocation4 + $0x11c] sm:$0xf]
        %v377 = vld [vmem:[#allocation4 + $0x120] sm:$0xff]
        %v378 = vld [vmem:[#allocation4 + $0x128] sm:$0xf]
        %v379 = vld [vmem:[#allocation4 + $0x12c] sm:$0xff]
        %v380 = vld [vmem:[#allocation4 + $0x134] sm:$0xf]
        %v381 = vld [vmem:[#allocation4 + $0x138] sm:$0xff]
        %v382 = vld [vmem:[#allocation4 + $0x140] sm:$0xf]
        %v383 = vld [vmem:[#allocation4 + $0x144] sm:$0xff]
        %v384 = vld [vmem:[#allocation4 + $0x14c] sm:$0xf]
        %v385 = vld [vmem:[#allocation4 + $0x150] sm:$0xff]
        %v386 = vld [vmem:[#allocation4 + $0x158] sm:$0xf]
        %v387 = vld [vmem:[#allocation4 + $0x15c] sm:$0xff]
        %v388 = vld [vmem:[#allocation4 + $0x164] sm:$0xf]
        %v389 = vld [vmem:[#allocation4 + $0x168] sm:$0xff]
        %v390 = vld [vmem:[#allocation4 + $0x170] sm:$0xf]
        %v391 = vld [vmem:[#allocation4 + $0x174] sm:$0xff]
        %v392 = vld [vmem:[#allocation4 + $0x17c] sm:$0xf]
        %v393 = vld [vmem:[#allocation4 + $0x180] sm:$0xff]
        %v394 = vld [vmem:[#allocation4 + $0x188] sm:$0xf]
        %v395 = vld [vmem:[#allocation4 + $0x18c] sm:$0xff]
        %v396 = vld [vmem:[#allocation4 + $0x194] sm:$0xf]
        %v397 = vld [vmem:[#allocation4 + $0x198] sm:$0xff]
        %v398 = vld [vmem:[#allocation4 + $0x1a0] sm:$0xf]
        %v399 = vld [vmem:[#allocation4 + $0x1a4] sm:$0xff]
        %v400 = vld [vmem:[#allocation4 + $0x1ac] sm:$0xf]
        %v401 = vld [vmem:[#allocation4 + $0x1b0] sm:$0xff]
        %v402 = vld [vmem:[#allocation4 + $0x1b8] sm:$0xf]
        %v403 = vld [vmem:[#allocation4 + $0x1bc] sm:$0xff]
        %v404 = vld [vmem:[#allocation4 + $0x1c4] sm:$0xf]
        %v405 = vld [vmem:[#allocation4 + $0x1c8] sm:$0xff]
        %v406 = vld [vmem:[#allocation4 + $0x1d0] sm:$0xf]
        %v407 = vld [vmem:[#allocation4 + $0x1d4] sm:$0xff]
        %v408 = vld [vmem:[#allocation4 + $0x1dc] sm:$0xf]
        %v409 = vld [vmem:[#allocation4 + $0x1e0] sm:$0xff]
        %v410 = vld [vmem:[#allocation4 + $0x1e8] sm:$0xf]
        %v411 = vld [vmem:[#allocation4 + $0x1ec] sm:$0xff]
        %v412 = vld [vmem:[#allocation4 + $0x1f4] sm:$0xf]
        %v413 = vld [vmem:[#allocation4 + $0x1f8] sm:$0xff]
        %v414 = vld [vmem:[#allocation4 + $0x200] sm:$0xf]
        %v415 = vld [vmem:[#allocation4 + $0x204] sm:$0xff]
        %v416 = vld [vmem:[#allocation4 + $0x20c] sm:$0xf]
        %v417 = vld [vmem:[#allocation4 + $0x210] sm:$0xff]
        %v418 = vld [vmem:[#allocation4 + $0x218] sm:$0xf]
        %v419 = vld [vmem:[#allocation4 + $0x21c] sm:$0xff]
        %v420 = vld [vmem:[#allocation4 + $0x224] sm:$0xf]
        %v421 = vld [vmem:[#allocation4 + $0x228] sm:$0xff]
        %v422 = vld [vmem:[#allocation4 + $0x230] sm:$0xf]
        %v423 = vld [vmem:[#allocation4 + $0x234] sm:$0xff]
        %v424 = vld [vmem:[#allocation4 + $0x23c] sm:$0xf]
        %v521 = vunpack.c.l.b16 %v329
        %v522 = vunpack.c.h.b16 %v329
        %v523 = vunpack.c.l.b16 %v330
        %v524 = vunpack.c.l.b16 %v331
        %v525 = vunpack.c.h.b16 %v331
        %v526 = vunpack.c.l.b16 %v332
        %v527 = vunpack.c.l.b16 %v333
        %v528 = vunpack.c.h.b16 %v333
        %v529 = vunpack.c.l.b16 %v334
        %v530 = vunpack.c.l.b16 %v335
        %v531 = vunpack.c.h.b16 %v335
        %v532 = vunpack.c.l.b16 %v336
        %v533 = vunpack.c.l.b16 %v337
        %v534 = vunpack.c.h.b16 %v337
        %v535 = vunpack.c.l.b16 %v338
        %v536 = vunpack.c.l.b16 %v339
        %v537 = vunpack.c.h.b16 %v339
        %v538 = vunpack.c.l.b16 %v340
        %v539 = vunpack.c.l.b16 %v341
        %v540 = vunpack.c.h.b16 %v341
        %v541 = vunpack.c.l.b16 %v342
        %v542 = vunpack.c.l.b16 %v343
        %v543 = vunpack.c.h.b16 %v343
        %v544 = vunpack.c.l.b16 %v344
        %v545 = vunpack.c.l.b16 %v345
        %v546 = vunpack.c.h.b16 %v345
        %v547 = vunpack.c.l.b16 %v346
        %v548 = vunpack.c.l.b16 %v347
        %v549 = vunpack.c.h.b16 %v347
        %v550 = vunpack.c.l.b16 %v348
        %v551 = vunpack.c.l.b16 %v349
        %v552 = vunpack.c.h.b16 %v349
        %v553 = vunpack.c.l.b16 %v350
        %v554 = vunpack.c.l.b16 %v351
        %v555 = vunpack.c.h.b16 %v351
        %v556 = vunpack.c.l.b16 %v352
        %v557 = vunpack.c.l.b16 %v353
        %v558 = vunpack.c.h.b16 %v353
        %v559 = vunpack.c.l.b16 %v354
        %v560 = vunpack.c.l.b16 %v355
        %v561 = vunpack.c.h.b16 %v355
        %v562 = vunpack.c.l.b16 %v356
        %v563 = vunpack.c.l.b16 %v357
        %v564 = vunpack.c.h.b16 %v357
        %v565 = vunpack.c.l.b16 %v358
        %v566 = vunpack.c.l.b16 %v359
        %v567 = vunpack.c.h.b16 %v359
        %v568 = vunpack.c.l.b16 %v360
        %v569 = vunpack.c.l.b16 %v361
        %v570 = vunpack.c.h.b16 %v361
        %v571 = vunpack.c.l.b16 %v362
        %v572 = vunpack.c.l.b16 %v363
        %v573 = vunpack.c.h.b16 %v363
        %v574 = vunpack.c.l.b16 %v364
        %v575 = vunpack.c.l.b16 %v365
        %v576 = vunpack.c.h.b16 %v365
        %v577 = vunpack.c.l.b16 %v366
        %v578 = vunpack.c.l.b16 %v367
        %v579 = vunpack.c.h.b16 %v367
        %v580 = vunpack.c.l.b16 %v368
        %v581 = vunpack.c.l.b16 %v369
        %v582 = vunpack.c.h.b16 %v369
        %v583 = vunpack.c.l.b16 %v370
        %v584 = vunpack.c.l.b16 %v371
        %v585 = vunpack.c.h.b16 %v371
        %v586 = vunpack.c.l.b16 %v372
        %v587 = vunpack.c.l.b16 %v373
        %v588 = vunpack.c.h.b16 %v373
        %v589 = vunpack.c.l.b16 %v374
        %v590 = vunpack.c.l.b16 %v375
        %v591 = vunpack.c.h.b16 %v375
        %v592 = vunpack.c.l.b16 %v376
        %v593 = vunpack.c.l.b16 %v377
        %v594 = vunpack.c.h.b16 %v377
        %v595 = vunpack.c.l.b16 %v378
        %v596 = vunpack.c.l.b16 %v379
        %v597 = vunpack.c.h.b16 %v379
        %v598 = vunpack.c.l.b16 %v380
        %v599 = vunpack.c.l.b16 %v381
        %v600 = vunpack.c.h.b16 %v381
        %v601 = vunpack.c.l.b16 %v382
        %v602 = vunpack.c.l.b16 %v383
        %v603 = vunpack.c.h.b16 %v383
        %v604 = vunpack.c.l.b16 %v384
        %v605 = vunpack.c.l.b16 %v385
        %v606 = vunpack.c.h.b16 %v385
        %v607 = vunpack.c.l.b16 %v386
        %v608 = vunpack.c.l.b16 %v387
        %v609 = vunpack.c.h.b16 %v387
        %v610 = vunpack.c.l.b16 %v388
        %v611 = vunpack.c.l.b16 %v389
        %v612 = vunpack.c.h.b16 %v389
        %v613 = vunpack.c.l.b16 %v390
        %v614 = vunpack.c.l.b16 %v391
        %v615 = vunpack.c.h.b16 %v391
        %v616 = vunpack.c.l.b16 %v392
        %v617 = vunpack.c.l.b16 %v393
        %v618 = vunpack.c.h.b16 %v393
        %v619 = vunpack.c.l.b16 %v394
        %v620 = vunpack.c.l.b16 %v395
        %v621 = vunpack.c.h.b16 %v395
        %v622 = vunpack.c.l.b16 %v396
        %v623 = vunpack.c.l.b16 %v397
        %v624 = vunpack.c.h.b16 %v397
        %v625 = vunpack.c.l.b16 %v398
        %v626 = vunpack.c.l.b16 %v399
        %v627 = vunpack.c.h.b16 %v399
        %v628 = vunpack.c.l.b16 %v400
        %v629 = vunpack.c.l.b16 %v401
        %v630 = vunpack.c.h.b16 %v401
        %v631 = vunpack.c.l.b16 %v402
        %v632 = vunpack.c.l.b16 %v403
        %v633 = vunpack.c.h.b16 %v403
        %v634 = vunpack.c.l.b16 %v404
        %v635 = vunpack.c.l.b16 %v405
        %v636 = vunpack.c.h.b16 %v405
        %v637 = vunpack.c.l.b16 %v406
        %v638 = vunpack.c.l.b16 %v407
        %v639 = vunpack.c.h.b16 %v407
        %v640 = vunpack.c.l.b16 %v408
        %v641 = vunpack.c.l.b16 %v409
        %v642 = vunpack.c.h.b16 %v409
        %v643 = vunpack.c.l.b16 %v410
        %v644 = vunpack.c.l.b16 %v411
        %v645 = vunpack.c.h.b16 %v411
        %v646 = vunpack.c.l.b16 %v412
        %v647 = vunpack.c.l.b16 %v413
        %v648 = vunpack.c.h.b16 %v413
        %v649 = vunpack.c.l.b16 %v414
        %v650 = vunpack.c.l.b16 %v415
        %v651 = vunpack.c.h.b16 %v415
        %v652 = vunpack.c.l.b16 %v416
        %v653 = vunpack.c.l.b16 %v417
        %v654 = vunpack.c.h.b16 %v417
        %v655 = vunpack.c.l.b16 %v418
        %v656 = vunpack.c.l.b16 %v419
        %v657 = vunpack.c.h.b16 %v419
        %v658 = vunpack.c.l.b16 %v420
        %v659 = vunpack.c.l.b16 %v421
        %v660 = vunpack.c.h.b16 %v421
        %v661 = vunpack.c.l.b16 %v422
        %v662 = vunpack.c.l.b16 %v423
        %v663 = vunpack.c.h.b16 %v423
        %v664 = vunpack.c.l.b16 %v424
        %v665 = vpack.c.b16 %v524, %v521
        %v666 = vpack.c.b16 %v525, %v522
        %v667 = vpack.c.b16 %v526, %v523
        %v668 = vpack.c.b16 %v530, %v527
        %v669 = vpack.c.b16 %v531, %v528
        %v670 = vpack.c.b16 %v532, %v529
        %v671 = vpack.c.b16 %v536, %v533
        %v672 = vpack.c.b16 %v537, %v534
        %v673 = vpack.c.b16 %v538, %v535
        %v674 = vpack.c.b16 %v542, %v539
        %v675 = vpack.c.b16 %v543, %v540
        %v676 = vpack.c.b16 %v544, %v541
        %v677 = vpack.c.b16 %v548, %v545
        %v678 = vpack.c.b16 %v549, %v546
        %v679 = vpack.c.b16 %v550, %v547
        %v680 = vpack.c.b16 %v554, %v551
        %v681 = vpack.c.b16 %v555, %v552
        %v682 = vpack.c.b16 %v556, %v553
        %v683 = vpack.c.b16 %v560, %v557
        %v684 = vpack.c.b16 %v561, %v558
        %v685 = vpack.c.b16 %v562, %v559
        %v686 = vpack.c.b16 %v566, %v563
        %v687 = vpack.c.b16 %v567, %v564
        %v688 = vpack.c.b16 %v568, %v565
        %v689 = vpack.c.b16 %v572, %v569
        %v690 = vpack.c.b16 %v573, %v570
        %v691 = vpack.c.b16 %v574, %v571
        %v692 = vpack.c.b16 %v578, %v575
        %v693 = vpack.c.b16 %v579, %v576
        %v694 = vpack.c.b16 %v580, %v577
        %v695 = vpack.c.b16 %v584, %v581
        %v696 = vpack.c.b16 %v585, %v582
        %v697 = vpack.c.b16 %v586, %v583
        %v698 = vpack.c.b16 %v590, %v587
        %v699 = vpack.c.b16 %v591, %v588
        %v700 = vpack.c.b16 %v592, %v589
        %v701 = vpack.c.b16 %v596, %v593
        %v702 = vpack.c.b16 %v597, %v594
        %v703 = vpack.c.b16 %v598, %v595
        %v704 = vpack.c.b16 %v602, %v599
        %v705 = vpack.c.b16 %v603, %v600
        %v706 = vpack.c.b16 %v604, %v601
        %v707 = vpack.c.b16 %v608, %v605
        %v708 = vpack.c.b16 %v609, %v606
        %v709 = vpack.c.b16 %v610, %v607
        %v710 = vpack.c.b16 %v614, %v611
        %v711 = vpack.c.b16 %v615, %v612
        %v712 = vpack.c.b16 %v616, %v613
        %v713 = vpack.c.b16 %v620, %v617
        %v714 = vpack.c.b16 %v621, %v618
        %v715 = vpack.c.b16 %v622, %v619
        %v716 = vpack.c.b16 %v626, %v623
        %v717 = vpack.c.b16 %v627, %v624
        %v718 = vpack.c.b16 %v628, %v625
        %v719 = vpack.c.b16 %v632, %v629
        %v720 = vpack.c.b16 %v633, %v630
        %v721 = vpack.c.b16 %v634, %v631
        %v722 = vpack.c.b16 %v638, %v635
        %v723 = vpack.c.b16 %v639, %v636
        %v724 = vpack.c.b16 %v640, %v637
        %v725 = vpack.c.b16 %v644, %v641
        %v726 = vpack.c.b16 %v645, %v642
        %v727 = vpack.c.b16 %v646, %v643
        %v728 = vpack.c.b16 %v650, %v647
        %v729 = vpack.c.b16 %v651, %v648
        %v730 = vpack.c.b16 %v652, %v649
        %v731 = vpack.c.b16 %v656, %v653
        %v732 = vpack.c.b16 %v657, %v654
        %v733 = vpack.c.b16 %v658, %v655
        %v734 = vpack.c.b16 %v662, %v659
        %v735 = vpack.c.b16 %v663, %v660
        %v736 = vpack.c.b16 %v664, %v661
        %809 = vmatprep.subr.bf16.mxu0 %v666
        %810 = vmatpush1.bf16.msra.mxu0 %v665
        %811 = vmatprep.subr.bf16.mxu0 %v669
        %812 = vmatpush1.bf16.msra.mxu0 %v668
        %813 = vmatprep.subr.bf16.mxu0 %v672
        %814 = vmatpush1.bf16.msra.mxu0 %v671
        %815 = vmatprep.subr.bf16.mxu0 %v675
        %816 = vmatpush1.bf16.msra.mxu0 %v674
        %817 = vmatprep.subr.bf16.mxu0 %v678
        %818 = vmatpush1.bf16.msra.mxu0 %v677
        %819 = vmatprep.subr.bf16.mxu0 %v681
        %820 = vmatpush1.bf16.msra.mxu0 %v680
        %821 = vmatprep.subr.bf16.mxu0 %v684
        %822 = vmatpush1.bf16.msra.mxu0 %v683
        %823 = vmatprep.subr.bf16.mxu0 %v687
        %824 = vmatpush1.bf16.msra.mxu0 %v686
        %825 = vmatprep.subr.bf16.mxu0 %v690
        %826 = vmatpush1.bf16.msra.mxu0 %v689
        %827 = vmatprep.subr.bf16.mxu0 %v693
        %828 = vmatpush1.bf16.msra.mxu0 %v692
        %829 = vmatprep.subr.bf16.mxu0 %v696
        %830 = vmatpush1.bf16.msra.mxu0 %v695
        %831 = vmatprep.subr.bf16.mxu0 %v699
        %832 = vmatpush1.bf16.msra.mxu0 %v698
        %833 = vmatprep.subr.bf16.mxu0 %v702
        %834 = vmatpush1.bf16.msra.mxu0 %v701
        %835 = vmatprep.subr.bf16.mxu0 %v705
        %836 = vmatpush1.bf16.msra.mxu0 %v704
        %837 = vmatprep.subr.bf16.mxu0 %v708
        %838 = vmatpush1.bf16.msra.mxu0 %v707
        %839 = vmatprep.subr.bf16.mxu0 %v711
        %840 = vmatpush1.bf16.msra.mxu0 %v710
        %841 = vmatprep.mubr.bf16.mxu0 %v282
        %842 = vmatmul.mubr.bf16.gmra.mrb[0].mxu0 %v281
        %v843 = vpop.f32.mrb[0].mxu0
        %v844 = vadd.f32 0.0, %v843
        %v845 = vpop.f32.mrb[0].mxu0
        %v846 = vadd.f32 0.0, %v845
        %v847 = vpop.f32.mrb[0].mxu0
        %v848 = vadd.f32 0.0, %v847
        %v849 = vpop.f32.mrb[0].mxu0
        %v850 = vadd.f32 0.0, %v849
        %851 = vmatprep.mubr.bf16.mxu0 %v285
        %852 = vmatmul.mubr.bf16.gmra.mrb[0].mxu0 %v284
        %v853 = vpop.f32.mrb[0].mxu0
        %v854 = vadd.f32 0.0, %v853
        %v855 = vpop.f32.mrb[0].mxu0
        %v856 = vadd.f32 0.0, %v855
        %v857 = vpop.f32.mrb[0].mxu0
        %v858 = vadd.f32 0.0, %v857
        %v859 = vpop.f32.mrb[0].mxu0
        %v860 = vadd.f32 0.0, %v859
        %861 = vmatprep.mubr.bf16.mxu0 %v288
        %862 = vmatmul.mubr.bf16.gmra.mrb[0].mxu0 %v287
        %v863 = vpop.f32.mrb[0].mxu0
        %v864 = vadd.f32 0.0, %v863
        %v865 = vpop.f32.mrb[0].mxu0
        %v866 = vadd.f32 0.0, %v865
        %v867 = vpop.f32.mrb[0].mxu0
        %v868 = vadd.f32 0.0, %v867
        %v869 = vpop.f32.mrb[0].mxu0
        %v870 = vadd.f32 0.0, %v869
        %871 = vmatprep.mubr.bf16.mxu0 %v291
        %872 = vmatmul.mubr.bf16.gmra.mrb[0].mxu0 %v290
        %v873 = vpop.f32.mrb[0].mxu0
        %v874 = vadd.f32 0.0, %v873
        %v875 = vpop.f32.mrb[0].mxu0
        %v876 = vadd.f32 0.0, %v875
        %v877 = vpop.f32.mrb[0].mxu0
        %v878 = vadd.f32 0.0, %v877
        %v879 = vpop.f32.mrb[0].mxu0
        %v880 = vadd.f32 0.0, %v879
        %881 = vmatprep.mubr.bf16.mxu0 %v294
        %882 = vmatmul.mubr.bf16.gmra.mrb[0].mxu0 %v293
        %v883 = vpop.f32.mrb[0].mxu0
        %v884 = vadd.f32 0.0, %v883
        %v885 = vpop.f32.mrb[0].mxu0
        %v886 = vadd.f32 0.0, %v885
        %v887 = vpop.f32.mrb[0].mxu0
        %v888 = vadd.f32 0.0, %v887
        %v889 = vpop.f32.mrb[0].mxu0
        %v890 = vadd.f32 0.0, %v889
        %891 = vmatprep.mubr.bf16.mxu0 %v297
        %892 = vmatmul.mubr.bf16.gmra.mrb[0].mxu0 %v296
        %v893 = vpop.f32.mrb[0].mxu0
        %v894 = vadd.f32 0.0, %v893
        %v895 = vpop.f32.mrb[0].mxu0
        %v896 = vadd.f32 0.0, %v895
        %v897 = vpop.f32.mrb[0].mxu0
        %v898 = vadd.f32 0.0, %v897
        %v899 = vpop.f32.mrb[0].mxu0
        %v900 = vadd.f32 0.0, %v899
        %901 = vmatprep.mubr.bf16.mxu0 %v300
        %902 = vmatmul.mubr.bf16.gmra.mrb[0].mxu0 %v299
        %v903 = vpop.f32.mrb[0].mxu0
        %v904 = vadd.f32 0.0, %v903
        %v905 = vpop.f32.mrb[0].mxu0
        %v906 = vadd.f32 0.0, %v905
        %v907 = vpop.f32.mrb[0].mxu0
        %v908 = vadd.f32 0.0, %v907
        %v909 = vpop.f32.mrb[0].mxu0
        %v910 = vadd.f32 0.0, %v909
        %911 = vmatprep.mubr.bf16.mxu0 %v303
        %912 = vmatmul.mubr.bf16.gmra.mrb[0].mxu0 %v302
        %v913 = vpop.f32.mrb[0].mxu0
        %v914 = vadd.f32 0.0, %v913
        %v915 = vpop.f32.mrb[0].mxu0
        %v916 = vadd.f32 0.0, %v915
        %v917 = vpop.f32.mrb[0].mxu0
        %v918 = vadd.f32 0.0, %v917
        %v919 = vpop.f32.mrb[0].mxu0
        %v920 = vadd.f32 0.0, %v919
        %921 = vmatprep.mubr.bf16.mxu0 %v306
        %922 = vmatmul.mubr.bf16.gmra.mrb[0].mxu0 %v305
        %v923 = vpop.f32.mrb[0].mxu0
        %v924 = vadd.f32 0.0, %v923
        %v925 = vpop.f32.mrb[0].mxu0
        %v926 = vadd.f32 0.0, %v925
        %v927 = vpop.f32.mrb[0].mxu0
        %v928 = vadd.f32 0.0, %v927
        %v929 = vpop.f32.mrb[0].mxu0
        %v930 = vadd.f32 0.0, %v929
        %931 = vmatprep.mubr.bf16.mxu0 %v309
        %932 = vmatmul.mubr.bf16.gmra.mrb[0].mxu0 %v308
        %v933 = vpop.f32.mrb[0].mxu0
        %v934 = vadd.f32 0.0, %v933
        %v935 = vpop.f32.mrb[0].mxu0
        %v936 = vadd.f32 0.0, %v935
        %v937 = vpop.f32.mrb[0].mxu0
        %v938 = vadd.f32 0.0, %v937
        %v939 = vpop.f32.mrb[0].mxu0
        %v940 = vadd.f32 0.0, %v939
        %941 = vmatprep.mubr.bf16.mxu0 %v312
        %942 = vmatmul.mubr.bf16.gmra.mrb[0].mxu0 %v311
        %v943 = vpop.f32.mrb[0].mxu0
        %v944 = vadd.f32 0.0, %v943
        %v945 = vpop.f32.mrb[0].mxu0
        %v946 = vadd.f32 0.0, %v945
        %v947 = vpop.f32.mrb[0].mxu0
        %v948 = vadd.f32 0.0, %v947
        %v949 = vpop.f32.mrb[0].mxu0
        %v950 = vadd.f32 0.0, %v949
        %951 = vmatprep.mubr.bf16.mxu0 %v315
        %952 = vmatmul.mubr.bf16.gmra.mrb[0].mxu0 %v314
        %v953 = vpop.f32.mrb[0].mxu0
        %v954 = vadd.f32 0.0, %v953
        %v955 = vpop.f32.mrb[0].mxu0
        %v956 = vadd.f32 0.0, %v955
        %v957 = vpop.f32.mrb[0].mxu0
        %v958 = vadd.f32 0.0, %v957
        %v959 = vpop.f32.mrb[0].mxu0
        %v960 = vadd.f32 0.0, %v959
        %961 = vmatprep.mubr.bf16.mxu0 %v318
        %962 = vmatmul.mubr.bf16.gmra.mrb[0].mxu0 %v317
        %v963 = vpop.f32.mrb[0].mxu0
        %v964 = vadd.f32 0.0, %v963
        %v965 = vpop.f32.mrb[0].mxu0
        %v966 = vadd.f32 0.0, %v965
        %v967 = vpop.f32.mrb[0].mxu0
        %v968 = vadd.f32 0.0, %v967
        %v969 = vpop.f32.mrb[0].mxu0
        %v970 = vadd.f32 0.0, %v969
        %971 = vmatprep.mubr.bf16.mxu0 %v321
        %972 = vmatmul.mubr.bf16.gmra.mrb[0].mxu0 %v320
        %v973 = vpop.f32.mrb[0].mxu0
        %v974 = vadd.f32 0.0, %v973
        %v975 = vpop.f32.mrb[0].mxu0
        %v976 = vadd.f32 0.0, %v975
        %v977 = vpop.f32.mrb[0].mxu0
        %v978 = vadd.f32 0.0, %v977
        %v979 = vpop.f32.mrb[0].mxu0
        %v980 = vadd.f32 0.0, %v979
        %981 = vmatprep.mubr.bf16.mxu0 %v324
        %982 = vmatmul.mubr.bf16.gmra.mrb[0].mxu0 %v323
        %v983 = vpop.f32.mrb[0].mxu0
        %v984 = vadd.f32 0.0, %v983
        %v985 = vpop.f32.mrb[0].mxu0
        %v986 = vadd.f32 0.0, %v985
        %v987 = vpop.f32.mrb[0].mxu0
        %v988 = vadd.f32 0.0, %v987
        %v989 = vpop.f32.mrb[0].mxu0
        %v990 = vadd.f32 0.0, %v989
        %991 = vmatprep.mubr.bf16.mxu0 %v327
        %992 = vmatmul.mubr.bf16.gmra.mrb[0].mxu0 %v326
        %v993 = vpop.f32.mrb[0].mxu0
        %v994 = vadd.f32 0.0, %v993
        %v995 = vpop.f32.mrb[0].mxu0
        %v996 = vadd.f32 0.0, %v995
        %v997 = vpop.f32.mrb[0].mxu0
        %v998 = vadd.f32 0.0, %v997
        %v999 = vpop.f32.mrb[0].mxu0
        %v1000 = vadd.f32 0.0, %v999
        %1001 = vdwg.mxu0
        %1002 = vmatprep.subr.bf16.mxu0 %v714
        %1003 = vmatpush1.bf16.msra.mxu0 %v713
        %1004 = vmatprep.subr.bf16.mxu0 %v717
        %1005 = vmatpush1.bf16.msra.mxu0 %v716
        %1006 = vmatprep.subr.bf16.mxu0 %v720
        %1007 = vmatpush1.bf16.msra.mxu0 %v719
        %1008 = vmatprep.subr.bf16.mxu0 %v723
        %1009 = vmatpush1.bf16.msra.mxu0 %v722
        %1010 = vmatprep.subr.bf16.mxu0 %v726
        %1011 = vmatpush1.bf16.msra.mxu0 %v725
        %1012 = vmatprep.subr.bf16.mxu0 %v729
        %1013 = vmatpush1.bf16.msra.mxu0 %v728
        %1014 = vmatprep.subr.bf16.mxu0 %v732
        %1015 = vmatpush1.bf16.msra.mxu0 %v731
        %1016 = vmatprep.subr.bf16.mxu0 %v735
        %1017 = vmatpush1.bf16.msra.mxu0 %v734
        %1018 = vmatprep.subr.bf16.mxu0 0
        %1019 = vmatpush1.bf16.msra.mxu0 0
        %1020 = vmatprep.subr.bf16.mxu0 0
        %1021 = vmatpush1.bf16.msra.mxu0 0
        %1022 = vmatprep.subr.bf16.mxu0 0
        %1023 = vmatpush1.bf16.msra.mxu0 0
        %1024 = vmatprep.subr.bf16.mxu0 0
        %1025 = vmatpush1.bf16.msra.mxu0 0
        %1026 = vmatprep.subr.bf16.mxu0 0
        %1027 = vmatpush1.bf16.msra.mxu0 0
        %1028 = vmatprep.subr.bf16.mxu0 0
        %1029 = vmatpush1.bf16.msra.mxu0 0
        %1030 = vmatprep.subr.bf16.mxu0 0
        %1031 = vmatpush1.bf16.msra.mxu0 0
        %1032 = vmatprep.subr.bf16.mxu0 0
        %1033 = vmatpush1.bf16.msra.mxu0 0
        %1034 = vmatprep.mubr.bf16.mxu0 0
        %1035 = vmatmul.mubr.bf16.gmra.mrb[0].mxu0 %v283
        %v1036 = vpop.f32.mrb[0].mxu0
        %v1037 = vadd.f32 %v844, %v1036
        %v1038 = vpop.f32.mrb[0].mxu0
        %v1039 = vadd.f32 %v846, %v1038
        %v1040 = vpop.f32.mrb[0].mxu0
        %v1041 = vadd.f32 %v848, %v1040
        %v1042 = vpop.f32.mrb[0].mxu0
        %v1043 = vadd.f32 %v850, %v1042
        %1044 = vmatprep.mubr.bf16.mxu0 0
        %1045 = vmatmul.mubr.bf16.gmra.mrb[0].mxu0 %v286
        %v1046 = vpop.f32.mrb[0].mxu0
        %v1047 = vadd.f32 %v854, %v1046
        %v1048 = vpop.f32.mrb[0].mxu0
        %v1049 = vadd.f32 %v856, %v1048
        %v1050 = vpop.f32.mrb[0].mxu0
        %v1051 = vadd.f32 %v858, %v1050
        %v1052 = vpop.f32.mrb[0].mxu0
        %v1053 = vadd.f32 %v860, %v1052
        %1054 = vmatprep.mubr.bf16.mxu0 0
        %1055 = vmatmul.mubr.bf16.gmra.mrb[0].mxu0 %v289
        %v1056 = vpop.f32.mrb[0].mxu0
        %v1057 = vadd.f32 %v864, %v1056
        %v1058 = vpop.f32.mrb[0].mxu0
        %v1059 = vadd.f32 %v866, %v1058
        %v1060 = vpop.f32.mrb[0].mxu0
        %v1061 = vadd.f32 %v868, %v1060
        %v1062 = vpop.f32.mrb[0].mxu0
        %v1063 = vadd.f32 %v870, %v1062
        %1064 = vmatprep.mubr.bf16.mxu0 0
        %1065 = vmatmul.mubr.bf16.gmra.mrb[0].mxu0 %v292
        %v1066 = vpop.f32.mrb[0].mxu0
        %v1067 = vadd.f32 %v874, %v1066
        %v1068 = vpop.f32.mrb[0].mxu0
        %v1069 = vadd.f32 %v876, %v1068
        %v1070 = vpop.f32.mrb[0].mxu0
        %v1071 = vadd.f32 %v878, %v1070
        %v1072 = vpop.f32.mrb[0].mxu0
        %v1073 = vadd.f32 %v880, %v1072
        %1074 = vmatprep.mubr.bf16.mxu0 0
        %1075 = vmatmul.mubr.bf16.gmra.mrb[0].mxu0 %v295
        %v1076 = vpop.f32.mrb[0].mxu0
        %v1077 = vadd.f32 %v884, %v1076
        %v1078 = vpop.f32.mrb[0].mxu0
        %v1079 = vadd.f32 %v886, %v1078
        %v1080 = vpop.f32.mrb[0].mxu0
        %v1081 = vadd.f32 %v888, %v1080
        %v1082 = vpop.f32.mrb[0].mxu0
        %v1083 = vadd.f32 %v890, %v1082
        %1084 = vmatprep.mubr.bf16.mxu0 0
        %1085 = vmatmul.mubr.bf16.gmra.mrb[0].mxu0 %v298
        %v1086 = vpop.f32.mrb[0].mxu0
        %v1087 = vadd.f32 %v894, %v1086
        %v1088 = vpop.f32.mrb[0].mxu0
        %v1089 = vadd.f32 %v896, %v1088
        %v1090 = vpop.f32.mrb[0].mxu0
        %v1091 = vadd.f32 %v898, %v1090
        %v1092 = vpop.f32.mrb[0].mxu0
        %v1093 = vadd.f32 %v900, %v1092
        %1094 = vmatprep.mubr.bf16.mxu0 0
        %1095 = vmatmul.mubr.bf16.gmra.mrb[0].mxu0 %v301
        %v1096 = vpop.f32.mrb[0].mxu0
        %v1097 = vadd.f32 %v904, %v1096
        %v1098 = vpop.f32.mrb[0].mxu0
        %v1099 = vadd.f32 %v906, %v1098
        %v1100 = vpop.f32.mrb[0].mxu0
        %v1101 = vadd.f32 %v908, %v1100
        %v1102 = vpop.f32.mrb[0].mxu0
        %v1103 = vadd.f32 %v910, %v1102
        %1104 = vmatprep.mubr.bf16.mxu0 0
        %1105 = vmatmul.mubr.bf16.gmra.mrb[0].mxu0 %v304
        %v1106 = vpop.f32.mrb[0].mxu0
        %v1107 = vadd.f32 %v914, %v1106
        %v1108 = vpop.f32.mrb[0].mxu0
        %v1109 = vadd.f32 %v916, %v1108
        %v1110 = vpop.f32.mrb[0].mxu0
        %v1111 = vadd.f32 %v918, %v1110
        %v1112 = vpop.f32.mrb[0].mxu0
        %v1113 = vadd.f32 %v920, %v1112
        %1114 = vmatprep.mubr.bf16.mxu0 0
        %1115 = vmatmul.mubr.bf16.gmra.mrb[0].mxu0 %v307
        %v1116 = vpop.f32.mrb[0].mxu0
        %v1117 = vadd.f32 %v924, %v1116
        %v1118 = vpop.f32.mrb[0].mxu0
        %v1119 = vadd.f32 %v926, %v1118
        %v1120 = vpop.f32.mrb[0].mxu0
        %v1121 = vadd.f32 %v928, %v1120
        %v1122 = vpop.f32.mrb[0].mxu0
        %v1123 = vadd.f32 %v930, %v1122
        %1124 = vmatprep.mubr.bf16.mxu0 0
        %1125 = vmatmul.mubr.bf16.gmra.mrb[0].mxu0 %v310
        %v1126 = vpop.f32.mrb[0].mxu0
        %v1127 = vadd.f32 %v934, %v1126
        %v1128 = vpop.f32.mrb[0].mxu0
        %v1129 = vadd.f32 %v936, %v1128
        %v1130 = vpop.f32.mrb[0].mxu0
        %v1131 = vadd.f32 %v938, %v1130
        %v1132 = vpop.f32.mrb[0].mxu0
        %v1133 = vadd.f32 %v940, %v1132
        %1134 = vmatprep.mubr.bf16.mxu0 0
        %1135 = vmatmul.mubr.bf16.gmra.mrb[0].mxu0 %v313
        %v1136 = vpop.f32.mrb[0].mxu0
        %v1137 = vadd.f32 %v944, %v1136
        %v1138 = vpop.f32.mrb[0].mxu0
        %v1139 = vadd.f32 %v946, %v1138
        %v1140 = vpop.f32.mrb[0].mxu0
        %v1141 = vadd.f32 %v948, %v1140
        %v1142 = vpop.f32.mrb[0].mxu0
        %v1143 = vadd.f32 %v950, %v1142
        %1144 = vmatprep.mubr.bf16.mxu0 0
        %1145 = vmatmul.mubr.bf16.gmra.mrb[0].mxu0 %v316
        %v1146 = vpop.f32.mrb[0].mxu0
        %v1147 = vadd.f32 %v954, %v1146
        %v1148 = vpop.f32.mrb[0].mxu0
        %v1149 = vadd.f32 %v956, %v1148
        %v1150 = vpop.f32.mrb[0].mxu0
        %v1151 = vadd.f32 %v958, %v1150
        %v1152 = vpop.f32.mrb[0].mxu0
        %v1153 = vadd.f32 %v960, %v1152
        %1154 = vmatprep.mubr.bf16.mxu0 0
        %1155 = vmatmul.mubr.bf16.gmra.mrb[0].mxu0 %v319
        %v1156 = vpop.f32.mrb[0].mxu0
        %v1157 = vadd.f32 %v964, %v1156
        %v1158 = vpop.f32.mrb[0].mxu0
        %v1159 = vadd.f32 %v966, %v1158
        %v1160 = vpop.f32.mrb[0].mxu0
        %v1161 = vadd.f32 %v968, %v1160
        %v1162 = vpop.f32.mrb[0].mxu0
        %v1163 = vadd.f32 %v970, %v1162
        %1164 = vmatprep.mubr.bf16.mxu0 0
        %1165 = vmatmul.mubr.bf16.gmra.mrb[0].mxu0 %v322
        %v1166 = vpop.f32.mrb[0].mxu0
        %v1167 = vadd.f32 %v974, %v1166
        %v1168 = vpop.f32.mrb[0].mxu0
        %v1169 = vadd.f32 %v976, %v1168
        %v1170 = vpop.f32.mrb[0].mxu0
        %v1171 = vadd.f32 %v978, %v1170
        %v1172 = vpop.f32.mrb[0].mxu0
        %v1173 = vadd.f32 %v980, %v1172
        %1174 = vmatprep.mubr.bf16.mxu0 0
        %1175 = vmatmul.mubr.bf16.gmra.mrb[0].mxu0 %v325
        %v1176 = vpop.f32.mrb[0].mxu0
        %v1177 = vadd.f32 %v984, %v1176
        %v1178 = vpop.f32.mrb[0].mxu0
        %v1179 = vadd.f32 %v986, %v1178
        %v1180 = vpop.f32.mrb[0].mxu0
        %v1181 = vadd.f32 %v988, %v1180
        %v1182 = vpop.f32.mrb[0].mxu0
        %v1183 = vadd.f32 %v990, %v1182
        %1184 = vmatprep.mubr.bf16.mxu0 0
        %1185 = vmatmul.mubr.bf16.gmra.mrb[0].mxu0 %v328
        %v1186 = vpop.f32.mrb[0].mxu0
        %v1187 = vadd.f32 %v994, %v1186
        %v1188 = vpop.f32.mrb[0].mxu0
        %v1189 = vadd.f32 %v996, %v1188
        %v1190 = vpop.f32.mrb[0].mxu0
        %v1191 = vadd.f32 %v998, %v1190
        %v1192 = vpop.f32.mrb[0].mxu0
        %v1193 = vadd.f32 %v1000, %v1192
        %1194 = vdwg.mxu0
        %1195 = vmatprep.subr.bf16.mxu0 0
        %1196 = vmatpush1.bf16.msra.mxu0 %v667
        %1197 = vmatprep.subr.bf16.mxu0 0
        %1198 = vmatpush1.bf16.msra.mxu0 %v670
        %1199 = vmatprep.subr.bf16.mxu0 0
        %1200 = vmatpush1.bf16.msra.mxu0 %v673
        %1201 = vmatprep.subr.bf16.mxu0 0
        %1202 = vmatpush1.bf16.msra.mxu0 %v676
        %1203 = vmatprep.subr.bf16.mxu0 0
        %1204 = vmatpush1.bf16.msra.mxu0 %v679
        %1205 = vmatprep.subr.bf16.mxu0 0
        %1206 = vmatpush1.bf16.msra.mxu0 %v682
        %1207 = vmatprep.subr.bf16.mxu0 0
        %1208 = vmatpush1.bf16.msra.mxu0 %v685
        %1209 = vmatprep.subr.bf16.mxu0 0
        %1210 = vmatpush1.bf16.msra.mxu0 %v688
        %1211 = vmatprep.subr.bf16.mxu0 0
        %1212 = vmatpush1.bf16.msra.mxu0 %v691
        %1213 = vmatprep.subr.bf16.mxu0 0
        %1214 = vmatpush1.bf16.msra.mxu0 %v694
        %1215 = vmatprep.subr.bf16.mxu0 0
        %1216 = vmatpush1.bf16.msra.mxu0 %v697
        %1217 = vmatprep.subr.bf16.mxu0 0
        %1218 = vmatpush1.bf16.msra.mxu0 %v700
        %1219 = vmatprep.subr.bf16.mxu0 0
        %1220 = vmatpush1.bf16.msra.mxu0 %v703
        %1221 = vmatprep.subr.bf16.mxu0 0
        %1222 = vmatpush1.bf16.msra.mxu0 %v706
        %1223 = vmatprep.subr.bf16.mxu0 0
        %1224 = vmatpush1.bf16.msra.mxu0 %v709
        %1225 = vmatprep.subr.bf16.mxu0 0
        %1226 = vmatpush1.bf16.msra.mxu0 %v712
        %1227 = vmatprep.mubr.bf16.mxu0 %v282
        %1228 = vmatmul.mubr.bf16.gmra.mrb[0].mxu0 %v281
        %v1229 = vpop.f32.mrb[0].mxu0
        %v1230 = vadd.f32 0.0, %v1229
        %v1231 = vpop.f32.mrb[0].mxu0
        %v1232 = vpop.f32.mrb[0].mxu0
        %v1233 = vadd.f32 0.0, %v1232
        %v1234 = vpop.f32.mrb[0].mxu0
        %1235 = vmatprep.mubr.bf16.mxu0 %v285
        %1236 = vmatmul.mubr.bf16.gmra.mrb[0].mxu0 %v284
        %v1237 = vpop.f32.mrb[0].mxu0
        %v1238 = vadd.f32 0.0, %v1237
        %v1239 = vpop.f32.mrb[0].mxu0
        %v1240 = vpop.f32.mrb[0].mxu0
        %v1241 = vadd.f32 0.0, %v1240
        %v1242 = vpop.f32.mrb[0].mxu0
        %1243 = vmatprep.mubr.bf16.mxu0 %v288
        %1244 = vmatmul.mubr.bf16.gmra.mrb[0].mxu0 %v287
        %v1245 = vpop.f32.mrb[0].mxu0
        %v1246 = vadd.f32 0.0, %v1245
        %v1247 = vpop.f32.mrb[0].mxu0
        %v1248 = vpop.f32.mrb[0].mxu0
        %v1249 = vadd.f32 0.0, %v1248
        %v1250 = vpop.f32.mrb[0].mxu0
        %1251 = vmatprep.mubr.bf16.mxu0 %v291
        %1252 = vmatmul.mubr.bf16.gmra.mrb[0].mxu0 %v290
        %v1253 = vpop.f32.mrb[0].mxu0
        %v1254 = vadd.f32 0.0, %v1253
        %v1255 = vpop.f32.mrb[0].mxu0
        %v1256 = vpop.f32.mrb[0].mxu0
        %v1257 = vadd.f32 0.0, %v1256
        %v1258 = vpop.f32.mrb[0].mxu0
        %1259 = vmatprep.mubr.bf16.mxu0 %v294
        %1260 = vmatmul.mubr.bf16.gmra.mrb[0].mxu0 %v293
        %v1261 = vpop.f32.mrb[0].mxu0
        %v1262 = vadd.f32 0.0, %v1261
        %v1263 = vpop.f32.mrb[0].mxu0
        %v1264 = vpop.f32.mrb[0].mxu0
        %v1265 = vadd.f32 0.0, %v1264
        %v1266 = vpop.f32.mrb[0].mxu0
        %1267 = vmatprep.mubr.bf16.mxu0 %v297
        %1268 = vmatmul.mubr.bf16.gmra.mrb[0].mxu0 %v296
        %v1269 = vpop.f32.mrb[0].mxu0
        %v1270 = vadd.f32 0.0, %v1269
        %v1271 = vpop.f32.mrb[0].mxu0
        %v1272 = vpop.f32.mrb[0].mxu0
        %v1273 = vadd.f32 0.0, %v1272
        %v1274 = vpop.f32.mrb[0].mxu0
        %1275 = vmatprep.mubr.bf16.mxu0 %v300
        %1276 = vmatmul.mubr.bf16.gmra.mrb[0].mxu0 %v299
        %v1277 = vpop.f32.mrb[0].mxu0
        %v1278 = vadd.f32 0.0, %v1277
        %v1279 = vpop.f32.mrb[0].mxu0
        %v1280 = vpop.f32.mrb[0].mxu0
        %v1281 = vadd.f32 0.0, %v1280
        %v1282 = vpop.f32.mrb[0].mxu0
        %1283 = vmatprep.mubr.bf16.mxu0 %v303
        %1284 = vmatmul.mubr.bf16.gmra.mrb[0].mxu0 %v302
        %v1285 = vpop.f32.mrb[0].mxu0
        %v1286 = vadd.f32 0.0, %v1285
        %v1287 = vpop.f32.mrb[0].mxu0
        %v1288 = vpop.f32.mrb[0].mxu0
        %v1289 = vadd.f32 0.0, %v1288
        %v1290 = vpop.f32.mrb[0].mxu0
        %1291 = vmatprep.mubr.bf16.mxu0 %v306
        %1292 = vmatmul.mubr.bf16.gmra.mrb[0].mxu0 %v305
        %v1293 = vpop.f32.mrb[0].mxu0
        %v1294 = vadd.f32 0.0, %v1293
        %v1295 = vpop.f32.mrb[0].mxu0
        %v1296 = vpop.f32.mrb[0].mxu0
        %v1297 = vadd.f32 0.0, %v1296
        %v1298 = vpop.f32.mrb[0].mxu0
        %1299 = vmatprep.mubr.bf16.mxu0 %v309
        %1300 = vmatmul.mubr.bf16.gmra.mrb[0].mxu0 %v308
        %v1301 = vpop.f32.mrb[0].mxu0
        %v1302 = vadd.f32 0.0, %v1301
        %v1303 = vpop.f32.mrb[0].mxu0
        %v1304 = vpop.f32.mrb[0].mxu0
        %v1305 = vadd.f32 0.0, %v1304
        %v1306 = vpop.f32.mrb[0].mxu0
        %1307 = vmatprep.mubr.bf16.mxu0 %v312
        %1308 = vmatmul.mubr.bf16.gmra.mrb[0].mxu0 %v311
        %v1309 = vpop.f32.mrb[0].mxu0
        %v1310 = vadd.f32 0.0, %v1309
        %v1311 = vpop.f32.mrb[0].mxu0
        %v1312 = vpop.f32.mrb[0].mxu0
        %v1313 = vadd.f32 0.0, %v1312
        %v1314 = vpop.f32.mrb[0].mxu0
        %1315 = vmatprep.mubr.bf16.mxu0 %v315
        %1316 = vmatmul.mubr.bf16.gmra.mrb[0].mxu0 %v314
        %v1317 = vpop.f32.mrb[0].mxu0
        %v1318 = vadd.f32 0.0, %v1317
        %v1319 = vpop.f32.mrb[0].mxu0
        %v1320 = vpop.f32.mrb[0].mxu0
        %v1321 = vadd.f32 0.0, %v1320
        %v1322 = vpop.f32.mrb[0].mxu0
        %1323 = vmatprep.mubr.bf16.mxu0 %v318
        %1324 = vmatmul.mubr.bf16.gmra.mrb[0].mxu0 %v317
        %v1325 = vpop.f32.mrb[0].mxu0
        %v1326 = vadd.f32 0.0, %v1325
        %v1327 = vpop.f32.mrb[0].mxu0
        %v1328 = vpop.f32.mrb[0].mxu0
        %v1329 = vadd.f32 0.0, %v1328
        %v1330 = vpop.f32.mrb[0].mxu0
        %1331 = vmatprep.mubr.bf16.mxu0 %v321
        %1332 = vmatmul.mubr.bf16.gmra.mrb[0].mxu0 %v320
        %v1333 = vpop.f32.mrb[0].mxu0
        %v1334 = vadd.f32 0.0, %v1333
        %v1335 = vpop.f32.mrb[0].mxu0
        %v1336 = vpop.f32.mrb[0].mxu0
        %v1337 = vadd.f32 0.0, %v1336
        %v1338 = vpop.f32.mrb[0].mxu0
        %1339 = vmatprep.mubr.bf16.mxu0 %v324
        %1340 = vmatmul.mubr.bf16.gmra.mrb[0].mxu0 %v323
        %v1341 = vpop.f32.mrb[0].mxu0
        %v1342 = vadd.f32 0.0, %v1341
        %v1343 = vpop.f32.mrb[0].mxu0
        %v1344 = vpop.f32.mrb[0].mxu0
        %v1345 = vadd.f32 0.0, %v1344
        %v1346 = vpop.f32.mrb[0].mxu0
        %1347 = vmatprep.mubr.bf16.mxu0 %v327
        %1348 = vmatmul.mubr.bf16.gmra.mrb[0].mxu0 %v326
        %v1349 = vpop.f32.mrb[0].mxu0
        %v1350 = vadd.f32 0.0, %v1349
        %v1351 = vpop.f32.mrb[0].mxu0
        %v1352 = vpop.f32.mrb[0].mxu0
        %v1353 = vadd.f32 0.0, %v1352
        %v1354 = vpop.f32.mrb[0].mxu0
        %1355 = vdwg.mxu0
        %1356 = vmatprep.subr.bf16.mxu0 0
        %1357 = vmatpush1.bf16.msra.mxu0 %v715
        %1358 = vmatprep.subr.bf16.mxu0 0
        %1359 = vmatpush1.bf16.msra.mxu0 %v718
        %1360 = vmatprep.subr.bf16.mxu0 0
        %1361 = vmatpush1.bf16.msra.mxu0 %v721
        %1362 = vmatprep.subr.bf16.mxu0 0
        %1363 = vmatpush1.bf16.msra.mxu0 %v724
        %1364 = vmatprep.subr.bf16.mxu0 0
        %1365 = vmatpush1.bf16.msra.mxu0 %v727
        %1366 = vmatprep.subr.bf16.mxu0 0
        %1367 = vmatpush1.bf16.msra.mxu0 %v730
        %1368 = vmatprep.subr.bf16.mxu0 0
        %1369 = vmatpush1.bf16.msra.mxu0 %v733
        %1370 = vmatprep.subr.bf16.mxu0 0
        %1371 = vmatpush1.bf16.msra.mxu0 %v736
        %1372 = vmatprep.subr.bf16.mxu0 0
        %1373 = vmatpush1.bf16.msra.mxu0 0
        %1374 = vmatprep.subr.bf16.mxu0 0
        %1375 = vmatpush1.bf16.msra.mxu0 0
        %1376 = vmatprep.subr.bf16.mxu0 0
        %1377 = vmatpush1.bf16.msra.mxu0 0
        %1378 = vmatprep.subr.bf16.mxu0 0
        %1379 = vmatpush1.bf16.msra.mxu0 0
        %1380 = vmatprep.subr.bf16.mxu0 0
        %1381 = vmatpush1.bf16.msra.mxu0 0
        %1382 = vmatprep.subr.bf16.mxu0 0
        %1383 = vmatpush1.bf16.msra.mxu0 0
        %1384 = vmatprep.subr.bf16.mxu0 0
        %1385 = vmatpush1.bf16.msra.mxu0 0
        %1386 = vmatprep.subr.bf16.mxu0 0
        %1387 = vmatpush1.bf16.msra.mxu0 0
        %1388 = vmatprep.mubr.bf16.mxu0 0
        %1389 = vmatmul.mubr.bf16.gmra.mrb[0].mxu0 %v283
        %v1390 = vpop.f32.mrb[0].mxu0
        %v1391 = vadd.f32 %v1230, %v1390
        %v1392 = vpop.f32.mrb[0].mxu0
        %v1393 = vpop.f32.mrb[0].mxu0
        %v1394 = vadd.f32 %v1233, %v1393
        %v1395 = vpop.f32.mrb[0].mxu0
        %1396 = vmatprep.mubr.bf16.mxu0 0
        %1397 = vmatmul.mubr.bf16.gmra.mrb[0].mxu0 %v286
        %v1398 = vpop.f32.mrb[0].mxu0
        %v1399 = vadd.f32 %v1238, %v1398
        %v1400 = vpop.f32.mrb[0].mxu0
        %v1401 = vpop.f32.mrb[0].mxu0
        %v1402 = vadd.f32 %v1241, %v1401
        %v1403 = vpop.f32.mrb[0].mxu0
        %1404 = vmatprep.mubr.bf16.mxu0 0
        %1405 = vmatmul.mubr.bf16.gmra.mrb[0].mxu0 %v289
        %v1406 = vpop.f32.mrb[0].mxu0
        %v1407 = vadd.f32 %v1246, %v1406
        %v1408 = vpop.f32.mrb[0].mxu0
        %v1409 = vpop.f32.mrb[0].mxu0
        %v1410 = vadd.f32 %v1249, %v1409
        %v1411 = vpop.f32.mrb[0].mxu0
        %1412 = vmatprep.mubr.bf16.mxu0 0
        %1413 = vmatmul.mubr.bf16.gmra.mrb[0].mxu0 %v292
        %v1414 = vpop.f32.mrb[0].mxu0
        %v1415 = vadd.f32 %v1254, %v1414
        %v1416 = vpop.f32.mrb[0].mxu0
        %v1417 = vpop.f32.mrb[0].mxu0
        %v1418 = vadd.f32 %v1257, %v1417
        %v1419 = vpop.f32.mrb[0].mxu0
        %1420 = vmatprep.mubr.bf16.mxu0 0
        %1421 = vmatmul.mubr.bf16.gmra.mrb[0].mxu0 %v295
        %v1422 = vpop.f32.mrb[0].mxu0
        %v1423 = vadd.f32 %v1262, %v1422
        %v1424 = vpop.f32.mrb[0].mxu0
        %v1425 = vpop.f32.mrb[0].mxu0
        %v1426 = vadd.f32 %v1265, %v1425
        %v1427 = vpop.f32.mrb[0].mxu0
        %1428 = vmatprep.mubr.bf16.mxu0 0
        %1429 = vmatmul.mubr.bf16.gmra.mrb[0].mxu0 %v298
        %v1430 = vpop.f32.mrb[0].mxu0
        %v1431 = vadd.f32 %v1270, %v1430
        %v1432 = vpop.f32.mrb[0].mxu0
        %v1433 = vpop.f32.mrb[0].mxu0
        %v1434 = vadd.f32 %v1273, %v1433
        %v1435 = vpop.f32.mrb[0].mxu0
        %1436 = vmatprep.mubr.bf16.mxu0 0
        %1437 = vmatmul.mubr.bf16.gmra.mrb[0].mxu0 %v301
        %v1438 = vpop.f32.mrb[0].mxu0
        %v1439 = vadd.f32 %v1278, %v1438
        %v1440 = vpop.f32.mrb[0].mxu0
        %v1441 = vpop.f32.mrb[0].mxu0
        %v1442 = vadd.f32 %v1281, %v1441
        %v1443 = vpop.f32.mrb[0].mxu0
        %1444 = vmatprep.mubr.bf16.mxu0 0
        %1445 = vmatmul.mubr.bf16.gmra.mrb[0].mxu0 %v304
        %v1446 = vpop.f32.mrb[0].mxu0
        %v1447 = vadd.f32 %v1286, %v1446
        %v1448 = vpop.f32.mrb[0].mxu0
        %v1449 = vpop.f32.mrb[0].mxu0
        %v1450 = vadd.f32 %v1289, %v1449
        %v1451 = vpop.f32.mrb[0].mxu0
        %1452 = vmatprep.mubr.bf16.mxu0 0
        %1453 = vmatmul.mubr.bf16.gmra.mrb[0].mxu0 %v307
        %v1454 = vpop.f32.mrb[0].mxu0
        %v1455 = vadd.f32 %v1294, %v1454
        %v1456 = vpop.f32.mrb[0].mxu0
        %v1457 = vpop.f32.mrb[0].mxu0
        %v1458 = vadd.f32 %v1297, %v1457
        %v1459 = vpop.f32.mrb[0].mxu0
        %1460 = vmatprep.mubr.bf16.mxu0 0
        %1461 = vmatmul.mubr.bf16.gmra.mrb[0].mxu0 %v310
        %v1462 = vpop.f32.mrb[0].mxu0
        %v1463 = vadd.f32 %v1302, %v1462
        %v1464 = vpop.f32.mrb[0].mxu0
        %v1465 = vpop.f32.mrb[0].mxu0
        %v1466 = vadd.f32 %v1305, %v1465
        %v1467 = vpop.f32.mrb[0].mxu0
        %1468 = vmatprep.mubr.bf16.mxu0 0
        %1469 = vmatmul.mubr.bf16.gmra.mrb[0].mxu0 %v313
        %v1470 = vpop.f32.mrb[0].mxu0
        %v1471 = vadd.f32 %v1310, %v1470
        %v1472 = vpop.f32.mrb[0].mxu0
        %v1473 = vpop.f32.mrb[0].mxu0
        %v1474 = vadd.f32 %v1313, %v1473
        %v1475 = vpop.f32.mrb[0].mxu0
        %1476 = vmatprep.mubr.bf16.mxu0 0
        %1477 = vmatmul.mubr.bf16.gmra.mrb[0].mxu0 %v316
        %v1478 = vpop.f32.mrb[0].mxu0
        %v1479 = vadd.f32 %v1318, %v1478
        %v1480 = vpop.f32.mrb[0].mxu0
        %v1481 = vpop.f32.mrb[0].mxu0
        %v1482 = vadd.f32 %v1321, %v1481
        %v1483 = vpop.f32.mrb[0].mxu0
        %1484 = vmatprep.mubr.bf16.mxu0 0
        %1485 = vmatmul.mubr.bf16.gmra.mrb[0].mxu0 %v319
        %v1486 = vpop.f32.mrb[0].mxu0
        %v1487 = vadd.f32 %v1326, %v1486
        %v1488 = vpop.f32.mrb[0].mxu0
        %v1489 = vpop.f32.mrb[0].mxu0
        %v1490 = vadd.f32 %v1329, %v1489
        %v1491 = vpop.f32.mrb[0].mxu0
        %1492 = vmatprep.mubr.bf16.mxu0 0
        %1493 = vmatmul.mubr.bf16.gmra.mrb[0].mxu0 %v322
        %v1494 = vpop.f32.mrb[0].mxu0
        %v1495 = vadd.f32 %v1334, %v1494
        %v1496 = vpop.f32.mrb[0].mxu0
        %v1497 = vpop.f32.mrb[0].mxu0
        %v1498 = vadd.f32 %v1337, %v1497
        %v1499 = vpop.f32.mrb[0].mxu0
        %1500 = vmatprep.mubr.bf16.mxu0 0
        %1501 = vmatmul.mubr.bf16.gmra.mrb[0].mxu0 %v325
        %v1502 = vpop.f32.mrb[0].mxu0
        %v1503 = vadd.f32 %v1342, %v1502
        %v1504 = vpop.f32.mrb[0].mxu0
        %v1505 = vpop.f32.mrb[0].mxu0
        %v1506 = vadd.f32 %v1345, %v1505
        %v1507 = vpop.f32.mrb[0].mxu0
        %1508 = vmatprep.mubr.bf16.mxu0 0
        %1509 = vmatmul.mubr.bf16.gmra.mrb[0].mxu0 %v328
        %v1510 = vpop.f32.mrb[0].mxu0
        %v1511 = vadd.f32 %v1350, %v1510
        %v1512 = vpop.f32.mrb[0].mxu0
        %v1513 = vpop.f32.mrb[0].mxu0
        %v1514 = vadd.f32 %v1353, %v1513
        %v1515 = vpop.f32.mrb[0].mxu0
        %1516 = vdwg.mxu0
        %v1517 = vpack.c.bf16 %v1041, %v1037
        %v1518 = vpack.c.bf16 %v1051, %v1047
        %v1519 = vpack.c.bf16 %v1061, %v1057
        %v1520 = vpack.c.bf16 %v1071, %v1067
        %v1521 = vpack.c.bf16 %v1081, %v1077
        %v1522 = vpack.c.bf16 %v1091, %v1087
        %v1523 = vpack.c.bf16 %v1101, %v1097
        %v1524 = vpack.c.bf16 %v1111, %v1107
        %v1525 = vpack.c.bf16 %v1121, %v1117
        %v1526 = vpack.c.bf16 %v1131, %v1127
        %v1527 = vpack.c.bf16 %v1141, %v1137
        %v1528 = vpack.c.bf16 %v1151, %v1147
        %v1529 = vpack.c.bf16 %v1161, %v1157
        %v1530 = vpack.c.bf16 %v1171, %v1167
        %v1531 = vpack.c.bf16 %v1181, %v1177
        %v1532 = vpack.c.bf16 %v1191, %v1187
        %v1533 = vpack.c.bf16 %v1043, %v1039
        %v1534 = vpack.c.bf16 %v1053, %v1049
        %v1535 = vpack.c.bf16 %v1063, %v1059
        %v1536 = vpack.c.bf16 %v1073, %v1069
        %v1537 = vpack.c.bf16 %v1083, %v1079
        %v1538 = vpack.c.bf16 %v1093, %v1089
        %v1539 = vpack.c.bf16 %v1103, %v1099
        %v1540 = vpack.c.bf16 %v1113, %v1109
        %v1541 = vpack.c.bf16 %v1123, %v1119
        %v1542 = vpack.c.bf16 %v1133, %v1129
        %v1543 = vpack.c.bf16 %v1143, %v1139
        %v1544 = vpack.c.bf16 %v1153, %v1149
        %v1545 = vpack.c.bf16 %v1163, %v1159
        %v1546 = vpack.c.bf16 %v1173, %v1169
        %v1547 = vpack.c.bf16 %v1183, %v1179
        %v1548 = vpack.c.bf16 %v1193, %v1189
        %v1549 = vpack.c.bf16 %v1394, %v1391
        %v1550 = vpack.c.bf16 %v1402, %v1399
        %v1551 = vpack.c.bf16 %v1410, %v1407
        %v1552 = vpack.c.bf16 %v1418, %v1415
        %v1553 = vpack.c.bf16 %v1426, %v1423
        %v1554 = vpack.c.bf16 %v1434, %v1431
        %v1555 = vpack.c.bf16 %v1442, %v1439
        %v1556 = vpack.c.bf16 %v1450, %v1447
        %v1557 = vpack.c.bf16 %v1458, %v1455
        %v1558 = vpack.c.bf16 %v1466, %v1463
        %v1559 = vpack.c.bf16 %v1474, %v1471
        %v1560 = vpack.c.bf16 %v1482, %v1479
        %v1561 = vpack.c.bf16 %v1490, %v1487
        %v1562 = vpack.c.bf16 %v1498, %v1495
        %v1563 = vpack.c.bf16 %v1506, %v1503
        %v1564 = vpack.c.bf16 %v1514, %v1511
        %1565 = vmatprep.subr.bf16.mxu0 0
        %1566 = vmatpush1.bf16.xpose.msra.mxu0 %v1533
        %1567 = vmatprep.subr.bf16.mxu0 0
        %1568 = vmatpush1.bf16.xpose.msra.mxu0 %v1534
        %1569 = vmatprep.subr.bf16.mxu0 0
        %1570 = vmatpush1.bf16.xpose.msra.mxu0 %v1535
        %1571 = vmatprep.subr.bf16.mxu0 0
        %1572 = vmatpush1.bf16.xpose.msra.mxu0 %v1536
        %1573 = vmatprep.subr.bf16.mxu0 0
        %1574 = vmatpush1.bf16.xpose.msra.mxu0 %v1537
        %1575 = vmatprep.subr.bf16.mxu0 0
        %1576 = vmatpush1.bf16.xpose.msra.mxu0 %v1538
        %1577 = vmatprep.subr.bf16.mxu0 0
        %1578 = vmatpush1.bf16.xpose.msra.mxu0 %v1539
        %1579 = vmatprep.subr.bf16.mxu0 0
        %1580 = vmatpush1.bf16.xpose.msra.mxu0 %v1540
        %1581 = vmatprep.subr.bf16.mxu0 0
        %1582 = vmatpush1.bf16.xpose.msra.mxu0 0
        %1583 = vmatprep.subr.bf16.mxu0 0
        %1584 = vmatpush1.bf16.xpose.msra.mxu0 0
        %1585 = vmatprep.subr.bf16.mxu0 0
        %1586 = vmatpush1.bf16.xpose.msra.mxu0 0
        %1587 = vmatprep.subr.bf16.mxu0 0
        %1588 = vmatpush1.bf16.xpose.msra.mxu0 0
        %1589 = vmatprep.subr.bf16.mxu0 0
        %1590 = vmatpush1.bf16.xpose.msra.mxu0 0
        %1591 = vmatprep.subr.bf16.mxu0 0
        %1592 = vmatpush1.bf16.xpose.msra.mxu0 0
        %1593 = vmatprep.subr.bf16.mxu0 0
        %1594 = vmatpush1.bf16.xpose.msra.mxu0 0
        %1595 = vmatprep.subr.bf16.mxu0 0
        %1596 = vmatpush1.bf16.xpose.msra.mxu0 0
        %1597 = vmatprep.mubr.bf16.mxu0 0
        %1598 = vmatmul.mubr.bf16.gmra.mrb[0].mxu0 %v1517
        %v1599 = vpop.f32.mrb[0].mxu0
        %v1600 = vadd.f32 0.0, %v1599
        %v1601 = vpop.f32.mrb[0].mxu0
        %v1602 = vpop.f32.mrb[0].mxu0
        %v1603 = vadd.f32 0.0, %v1602
        %v1604 = vpop.f32.mrb[0].mxu0
        %1605 = vmatprep.mubr.bf16.mxu0 0
        %1606 = vmatmul.mubr.bf16.gmra.mrb[0].mxu0 %v1518
        %v1607 = vpop.f32.mrb[0].mxu0
        %v1608 = vadd.f32 0.0, %v1607
        %v1609 = vpop.f32.mrb[0].mxu0
        %v1610 = vpop.f32.mrb[0].mxu0
        %v1611 = vadd.f32 0.0, %v1610
        %v1612 = vpop.f32.mrb[0].mxu0
        %1613 = vmatprep.mubr.bf16.mxu0 0
        %1614 = vmatmul.mubr.bf16.gmra.mrb[0].mxu0 %v1519
        %v1615 = vpop.f32.mrb[0].mxu0
        %v1616 = vadd.f32 0.0, %v1615
        %v1617 = vpop.f32.mrb[0].mxu0
        %v1618 = vpop.f32.mrb[0].mxu0
        %v1619 = vadd.f32 0.0, %v1618
        %v1620 = vpop.f32.mrb[0].mxu0
        %1621 = vmatprep.mubr.bf16.mxu0 0
        %1622 = vmatmul.mubr.bf16.gmra.mrb[0].mxu0 %v1520
        %v1623 = vpop.f32.mrb[0].mxu0
        %v1624 = vadd.f32 0.0, %v1623
        %v1625 = vpop.f32.mrb[0].mxu0
        %v1626 = vpop.f32.mrb[0].mxu0
        %v1627 = vadd.f32 0.0, %v1626
        %v1628 = vpop.f32.mrb[0].mxu0
        %1629 = vmatprep.mubr.bf16.mxu0 0
        %1630 = vmatmul.mubr.bf16.gmra.mrb[0].mxu0 %v1521
        %v1631 = vpop.f32.mrb[0].mxu0
        %v1632 = vadd.f32 0.0, %v1631
        %v1633 = vpop.f32.mrb[0].mxu0
        %v1634 = vpop.f32.mrb[0].mxu0
        %v1635 = vadd.f32 0.0, %v1634
        %v1636 = vpop.f32.mrb[0].mxu0
        %1637 = vmatprep.mubr.bf16.mxu0 0
        %1638 = vmatmul.mubr.bf16.gmra.mrb[0].mxu0 %v1522
        %v1639 = vpop.f32.mrb[0].mxu0
        %v1640 = vadd.f32 0.0, %v1639
        %v1641 = vpop.f32.mrb[0].mxu0
        %v1642 = vpop.f32.mrb[0].mxu0
        %v1643 = vadd.f32 0.0, %v1642
        %v1644 = vpop.f32.mrb[0].mxu0
        %1645 = vmatprep.mubr.bf16.mxu0 0
        %1646 = vmatmul.mubr.bf16.gmra.mrb[0].mxu0 %v1523
        %v1647 = vpop.f32.mrb[0].mxu0
        %v1648 = vadd.f32 0.0, %v1647
        %v1649 = vpop.f32.mrb[0].mxu0
        %v1650 = vpop.f32.mrb[0].mxu0
        %v1651 = vadd.f32 0.0, %v1650
        %v1652 = vpop.f32.mrb[0].mxu0
        %1653 = vmatprep.mubr.bf16.mxu0 0
        %1654 = vmatmul.mubr.bf16.gmra.mrb[0].mxu0 %v1524
        %v1655 = vpop.f32.mrb[0].mxu0
        %v1656 = vadd.f32 0.0, %v1655
        %v1657 = vpop.f32.mrb[0].mxu0
        %v1658 = vpop.f32.mrb[0].mxu0
        %v1659 = vadd.f32 0.0, %v1658
        %v1660 = vpop.f32.mrb[0].mxu0
        %1661 = vdwg.mxu0
        %1662 = vmatprep.subr.bf16.mxu0 0
        %1663 = vmatpush1.bf16.xpose.msra.mxu0 %v1541
        %1664 = vmatprep.subr.bf16.mxu0 0
        %1665 = vmatpush1.bf16.xpose.msra.mxu0 %v1542
        %1666 = vmatprep.subr.bf16.mxu0 0
        %1667 = vmatpush1.bf16.xpose.msra.mxu0 %v1543
        %1668 = vmatprep.subr.bf16.mxu0 0
        %1669 = vmatpush1.bf16.xpose.msra.mxu0 %v1544
        %1670 = vmatprep.subr.bf16.mxu0 0
        %1671 = vmatpush1.bf16.xpose.msra.mxu0 %v1545
        %1672 = vmatprep.subr.bf16.mxu0 0
        %1673 = vmatpush1.bf16.xpose.msra.mxu0 %v1546
        %1674 = vmatprep.subr.bf16.mxu0 0
        %1675 = vmatpush1.bf16.xpose.msra.mxu0 %v1547
        %1676 = vmatprep.subr.bf16.mxu0 0
        %1677 = vmatpush1.bf16.xpose.msra.mxu0 %v1548
        %1678 = vmatprep.subr.bf16.mxu0 0
        %1679 = vmatpush1.bf16.xpose.msra.mxu0 0
        %1680 = vmatprep.subr.bf16.mxu0 0
        %1681 = vmatpush1.bf16.xpose.msra.mxu0 0
        %1682 = vmatprep.subr.bf16.mxu0 0
        %1683 = vmatpush1.bf16.xpose.msra.mxu0 0
        %1684 = vmatprep.subr.bf16.mxu0 0
        %1685 = vmatpush1.bf16.xpose.msra.mxu0 0
        %1686 = vmatprep.subr.bf16.mxu0 0
        %1687 = vmatpush1.bf16.xpose.msra.mxu0 0
        %1688 = vmatprep.subr.bf16.mxu0 0
        %1689 = vmatpush1.bf16.xpose.msra.mxu0 0
        %1690 = vmatprep.subr.bf16.mxu0 0
        %1691 = vmatpush1.bf16.xpose.msra.mxu0 0
        %1692 = vmatprep.subr.bf16.mxu0 0
        %1693 = vmatpush1.bf16.xpose.msra.mxu0 0
        %1694 = vmatprep.mubr.bf16.mxu0 0
        %1695 = vmatmul.mubr.bf16.gmra.mrb[0].mxu0 %v1525
        %v1696 = vpop.f32.mrb[0].mxu0
        %v1697 = vadd.f32 0.0, %v1696
        %v1698 = vpop.f32.mrb[0].mxu0
        %v1699 = vpop.f32.mrb[0].mxu0
        %v1700 = vadd.f32 0.0, %v1699
        %v1701 = vpop.f32.mrb[0].mxu0
        %1702 = vmatprep.mubr.bf16.mxu0 0
        %1703 = vmatmul.mubr.bf16.gmra.mrb[0].mxu0 %v1526
        %v1704 = vpop.f32.mrb[0].mxu0
        %v1705 = vadd.f32 0.0, %v1704
        %v1706 = vpop.f32.mrb[0].mxu0
        %v1707 = vpop.f32.mrb[0].mxu0
        %v1708 = vadd.f32 0.0, %v1707
        %v1709 = vpop.f32.mrb[0].mxu0
        %1710 = vmatprep.mubr.bf16.mxu0 0
        %1711 = vmatmul.mubr.bf16.gmra.mrb[0].mxu0 %v1527
        %v1712 = vpop.f32.mrb[0].mxu0
        %v1713 = vadd.f32 0.0, %v1712
        %v1714 = vpop.f32.mrb[0].mxu0
        %v1715 = vpop.f32.mrb[0].mxu0
        %v1716 = vadd.f32 0.0, %v1715
        %v1717 = vpop.f32.mrb[0].mxu0
        %1718 = vmatprep.mubr.bf16.mxu0 0
        %1719 = vmatmul.mubr.bf16.gmra.mrb[0].mxu0 %v1528
        %v1720 = vpop.f32.mrb[0].mxu0
        %v1721 = vadd.f32 0.0, %v1720
        %v1722 = vpop.f32.mrb[0].mxu0
        %v1723 = vpop.f32.mrb[0].mxu0
        %v1724 = vadd.f32 0.0, %v1723
        %v1725 = vpop.f32.mrb[0].mxu0
        %1726 = vmatprep.mubr.bf16.mxu0 0
        %1727 = vmatmul.mubr.bf16.gmra.mrb[0].mxu0 %v1529
        %v1728 = vpop.f32.mrb[0].mxu0
        %v1729 = vadd.f32 0.0, %v1728
        %v1730 = vpop.f32.mrb[0].mxu0
        %v1731 = vpop.f32.mrb[0].mxu0
        %v1732 = vadd.f32 0.0, %v1731
        %v1733 = vpop.f32.mrb[0].mxu0
        %1734 = vmatprep.mubr.bf16.mxu0 0
        %1735 = vmatmul.mubr.bf16.gmra.mrb[0].mxu0 %v1530
        %v1736 = vpop.f32.mrb[0].mxu0
        %v1737 = vadd.f32 0.0, %v1736
        %v1738 = vpop.f32.mrb[0].mxu0
        %v1739 = vpop.f32.mrb[0].mxu0
        %v1740 = vadd.f32 0.0, %v1739
        %v1741 = vpop.f32.mrb[0].mxu0
        %1742 = vmatprep.mubr.bf16.mxu0 0
        %1743 = vmatmul.mubr.bf16.gmra.mrb[0].mxu0 %v1531
        %v1744 = vpop.f32.mrb[0].mxu0
        %v1745 = vadd.f32 0.0, %v1744
        %v1746 = vpop.f32.mrb[0].mxu0
        %v1747 = vpop.f32.mrb[0].mxu0
        %v1748 = vadd.f32 0.0, %v1747
        %v1749 = vpop.f32.mrb[0].mxu0
        %1750 = vmatprep.mubr.bf16.mxu0 0
        %1751 = vmatmul.mubr.bf16.gmra.mrb[0].mxu0 %v1532
        %v1752 = vpop.f32.mrb[0].mxu0
        %v1753 = vadd.f32 0.0, %v1752
        %v1754 = vpop.f32.mrb[0].mxu0
        %v1755 = vpop.f32.mrb[0].mxu0
        %v1756 = vadd.f32 0.0, %v1755
        %v1757 = vpop.f32.mrb[0].mxu0
        %1758 = vdwg.mxu0
        %v1759 = vmul.f32 %v1600, 0.125
        %v1760 = vmul.f32 %v1603, 0.125
        %v1761 = vmul.f32 %v1608, 0.125
        %v1762 = vmul.f32 %v1611, 0.125
        %v1763 = vmul.f32 %v1616, 0.125
        %v1764 = vmul.f32 %v1619, 0.125
        %v1765 = vmul.f32 %v1624, 0.125
        %v1766 = vmul.f32 %v1627, 0.125
        %v1767 = vmul.f32 %v1632, 0.125
        %v1768 = vmul.f32 %v1635, 0.125
        %v1769 = vmul.f32 %v1640, 0.125
        %v1770 = vmul.f32 %v1643, 0.125
        %v1771 = vmul.f32 %v1648, 0.125
        %v1772 = vmul.f32 %v1651, 0.125
        %v1773 = vmul.f32 %v1656, 0.125
        %v1774 = vmul.f32 %v1659, 0.125
        %v1775 = vmul.f32 %v1697, 0.125
        %v1776 = vmul.f32 %v1700, 0.125
        %v1777 = vmul.f32 %v1705, 0.125
        %v1778 = vmul.f32 %v1708, 0.125
        %v1779 = vmul.f32 %v1713, 0.125
        %v1780 = vmul.f32 %v1716, 0.125
        %v1781 = vmul.f32 %v1721, 0.125
        %v1782 = vmul.f32 %v1724, 0.125
        %v1783 = vmul.f32 %v1729, 0.125
        %v1784 = vmul.f32 %v1732, 0.125
        %v1785 = vmul.f32 %v1737, 0.125
        %v1786 = vmul.f32 %v1740, 0.125
        %v1787 = vmul.f32 %v1745, 0.125
        %v1788 = vmul.f32 %v1748, 0.125
        %v1789 = vmul.f32 %v1753, 0.125
        %v1790 = vmul.f32 %v1756, 0.125
        %v1791 = vlaneseq
        %v1792 = vshrl.u32 %v1791, 7
        %v1793 = vadd.s32 %v1792, 8
        %v1794 = vadd.s32 %v1792, 16
        %v1795 = vadd.s32 %v1792, 24
        %v1796 = vadd.s32 %v1792, 32
        %v1797 = vadd.s32 %v1792, 40
        %v1798 = vadd.s32 %v1792, 48
        %v1799 = vadd.s32 %v1792, 56
        %v1800 = vadd.s32 %v1792, 64
        %v1801 = vadd.s32 %v1792, 72
        %v1802 = vadd.s32 %v1792, 80
        %v1803 = vadd.s32 %v1792, 88
        %v1804 = vadd.s32 %v1792, 96
        %v1805 = vadd.s32 %v1792, 104
        %v1806 = vadd.s32 %v1792, 112
        %v1807 = vadd.s32 %v1792, 120
        %v1808 = vlaneseq
        %v1809 = vand.u32 %v1808, 127
        %vm1810 = vcmp.le.s32.totalorder %v1809, %v1792
        %vm1811 = vcmp.le.s32.totalorder %v1809, %v1793
        %vm1812 = vcmp.le.s32.totalorder %v1809, %v1794
        %vm1813 = vcmp.le.s32.totalorder %v1809, %v1795
        %vm1814 = vcmp.le.s32.totalorder %v1809, %v1796
        %vm1815 = vcmp.le.s32.totalorder %v1809, %v1797
        %vm1816 = vcmp.le.s32.totalorder %v1809, %v1798
        %vm1817 = vcmp.le.s32.totalorder %v1809, %v1799
        %vm1818 = vcmp.le.s32.totalorder %v1809, %v1800
        %vm1819 = vcmp.le.s32.totalorder %v1809, %v1801
        %vm1820 = vcmp.le.s32.totalorder %v1809, %v1802
        %vm1821 = vcmp.le.s32.totalorder %v1809, %v1803
        %vm1822 = vcmp.le.s32.totalorder %v1809, %v1804
        %vm1823 = vcmp.le.s32.totalorder %v1809, %v1805
        %vm1824 = vcmp.le.s32.totalorder %v1809, %v1806
        %vm1825 = vcmp.le.s32.totalorder %v1809, %v1807
        %v1826 = vsel %vm1810, 1, 0
        %v1827 = vsel %vm1811, 1, 0
        %v1828 = vsel %vm1812, 1, 0
        %v1829 = vsel %vm1813, 1, 0
        %v1830 = vsel %vm1814, 1, 0
        %v1831 = vsel %vm1815, 1, 0
        %v1832 = vsel %vm1816, 1, 0
        %v1833 = vsel %vm1817, 1, 0
        %v1834 = vsel %vm1818, 1, 0
        %v1835 = vsel %vm1819, 1, 0
        %v1836 = vsel %vm1820, 1, 0
        %v1837 = vsel %vm1821, 1, 0
        %v1838 = vsel %vm1822, 1, 0
        %v1839 = vsel %vm1823, 1, 0
        %v1840 = vsel %vm1824, 1, 0
        %v1841 = vsel %vm1825, 1, 0
        %vm1842 = vcmp.eq.s32.totalorder %v1826, 1
        %vm1843 = vcmp.eq.s32.totalorder %v1827, 1
        %vm1844 = vcmp.eq.s32.totalorder %v1828, 1
        %vm1845 = vcmp.eq.s32.totalorder %v1829, 1
        %vm1846 = vcmp.eq.s32.totalorder %v1830, 1
        %vm1847 = vcmp.eq.s32.totalorder %v1831, 1
        %vm1848 = vcmp.eq.s32.totalorder %v1832, 1
        %vm1849 = vcmp.eq.s32.totalorder %v1833, 1
        %vm1850 = vcmp.eq.s32.totalorder %v1834, 1
        %vm1851 = vcmp.eq.s32.totalorder %v1835, 1
        %vm1852 = vcmp.eq.s32.totalorder %v1836, 1
        %vm1853 = vcmp.eq.s32.totalorder %v1837, 1
        %vm1854 = vcmp.eq.s32.totalorder %v1838, 1
        %vm1855 = vcmp.eq.s32.totalorder %v1839, 1
        %vm1856 = vcmp.eq.s32.totalorder %v1840, 1
        %vm1857 = vcmp.eq.s32.totalorder %v1841, 1
        %v1858 = vsel %vm1842, %v1759, -inf
        %v1859 = vsel %vm1843, %v1760, -inf
        %v1860 = vsel %vm1844, %v1761, -inf
        %v1861 = vsel %vm1845, %v1762, -inf
        %v1862 = vsel %vm1846, %v1763, -inf
        %v1863 = vsel %vm1847, %v1764, -inf
        %v1864 = vsel %vm1848, %v1765, -inf
        %v1865 = vsel %vm1849, %v1766, -inf
        %v1866 = vsel %vm1850, %v1767, -inf
        %v1867 = vsel %vm1851, %v1768, -inf
        %v1868 = vsel %vm1852, %v1769, -inf
        %v1869 = vsel %vm1853, %v1770, -inf
        %v1870 = vsel %vm1854, %v1771, -inf
        %v1871 = vsel %vm1855, %v1772, -inf
        %v1872 = vsel %vm1856, %v1773, -inf
        %v1873 = vsel %vm1857, %v1774, -inf
        %v1874 = vsel %vm1842, %v1775, -inf
        %v1875 = vsel %vm1843, %v1776, -inf
        %v1876 = vsel %vm1844, %v1777, -inf
        %v1877 = vsel %vm1845, %v1778, -inf
        %v1878 = vsel %vm1846, %v1779, -inf
        %v1879 = vsel %vm1847, %v1780, -inf
        %v1880 = vsel %vm1848, %v1781, -inf
        %v1881 = vsel %vm1849, %v1782, -inf
        %v1882 = vsel %vm1850, %v1783, -inf
        %v1883 = vsel %vm1851, %v1784, -inf
        %v1884 = vsel %vm1852, %v1785, -inf
        %v1885 = vsel %vm1853, %v1786, -inf
        %v1886 = vsel %vm1854, %v1787, -inf
        %v1887 = vsel %vm1855, %v1788, -inf
        %v1888 = vsel %vm1856, %v1789, -inf
        %v1889 = vsel %vm1857, %v1790, -inf
        %1890 = vmax.xlane.f32.xlu0 %v1858
        %v1891 = vpop.xlane.xlu0 %1890
        %1892 = vmax.xlane.f32.xlu0 %v1859
        %v1893 = vpop.xlane.xlu0 %1892
        %1894 = vmax.xlane.f32.xlu0 %v1860
        %v1895 = vpop.xlane.xlu0 %1894
        %1896 = vmax.xlane.f32.xlu0 %v1861
        %v1897 = vpop.xlane.xlu0 %1896
        %1898 = vmax.xlane.f32.xlu0 %v1862
        %v1899 = vpop.xlane.xlu0 %1898
        %1900 = vmax.xlane.f32.xlu0 %v1863
        %v1901 = vpop.xlane.xlu0 %1900
        %1902 = vmax.xlane.f32.xlu0 %v1864
        %v1903 = vpop.xlane.xlu0 %1902
        %1904 = vmax.xlane.f32.xlu0 %v1865
        %v1905 = vpop.xlane.xlu0 %1904
        %1906 = vmax.xlane.f32.xlu0 %v1866
        %v1907 = vpop.xlane.xlu0 %1906
        %1908 = vmax.xlane.f32.xlu0 %v1867
        %v1909 = vpop.xlane.xlu0 %1908
        %1910 = vmax.xlane.f32.xlu0 %v1868
        %v1911 = vpop.xlane.xlu0 %1910
        %1912 = vmax.xlane.f32.xlu0 %v1869
        %v1913 = vpop.xlane.xlu0 %1912
        %1914 = vmax.xlane.f32.xlu0 %v1870
        %v1915 = vpop.xlane.xlu0 %1914
        %1916 = vmax.xlane.f32.xlu0 %v1871
        %v1917 = vpop.xlane.xlu0 %1916
        %1918 = vmax.xlane.f32.xlu0 %v1872
        %v1919 = vpop.xlane.xlu0 %1918
        %1920 = vmax.xlane.f32.xlu0 %v1873
        %v1921 = vpop.xlane.xlu0 %1920
        %1922 = vmax.xlane.f32.xlu0 %v1874
        %v1923 = vpop.xlane.xlu0 %1922
        %1924 = vmax.xlane.f32.xlu0 %v1875
        %v1925 = vpop.xlane.xlu0 %1924
        %1926 = vmax.xlane.f32.xlu0 %v1876
        %v1927 = vpop.xlane.xlu0 %1926
        %1928 = vmax.xlane.f32.xlu0 %v1877
        %v1929 = vpop.xlane.xlu0 %1928
        %1930 = vmax.xlane.f32.xlu0 %v1878
        %v1931 = vpop.xlane.xlu0 %1930
        %1932 = vmax.xlane.f32.xlu0 %v1879
        %v1933 = vpop.xlane.xlu0 %1932
        %1934 = vmax.xlane.f32.xlu0 %v1880
        %v1935 = vpop.xlane.xlu0 %1934
        %1936 = vmax.xlane.f32.xlu0 %v1881
        %v1937 = vpop.xlane.xlu0 %1936
        %1938 = vmax.xlane.f32.xlu0 %v1882
        %v1939 = vpop.xlane.xlu0 %1938
        %1940 = vmax.xlane.f32.xlu0 %v1883
        %v1941 = vpop.xlane.xlu0 %1940
        %1942 = vmax.xlane.f32.xlu0 %v1884
        %v1943 = vpop.xlane.xlu0 %1942
        %1944 = vmax.xlane.f32.xlu0 %v1885
        %v1945 = vpop.xlane.xlu0 %1944
        %1946 = vmax.xlane.f32.xlu0 %v1886
        %v1947 = vpop.xlane.xlu0 %1946
        %1948 = vmax.xlane.f32.xlu0 %v1887
        %v1949 = vpop.xlane.xlu0 %1948
        %1950 = vmax.xlane.f32.xlu0 %v1888
        %v1951 = vpop.xlane.xlu0 %1950
        %1952 = vmax.xlane.f32.xlu0 %v1889
        %v1953 = vpop.xlane.xlu0 %1952
        %v1954 = vsub.f32 %v1858, %v1891
        %v1955 = vsub.f32 %v1859, %v1893
        %v1956 = vsub.f32 %v1860, %v1895
        %v1957 = vsub.f32 %v1861, %v1897
        %v1958 = vsub.f32 %v1862, %v1899
        %v1959 = vsub.f32 %v1863, %v1901
        %v1960 = vsub.f32 %v1864, %v1903
        %v1961 = vsub.f32 %v1865, %v1905
        %v1962 = vsub.f32 %v1866, %v1907
        %v1963 = vsub.f32 %v1867, %v1909
        %v1964 = vsub.f32 %v1868, %v1911
        %v1965 = vsub.f32 %v1869, %v1913
        %v1966 = vsub.f32 %v1870, %v1915
        %v1967 = vsub.f32 %v1871, %v1917
        %v1968 = vsub.f32 %v1872, %v1919
        %v1969 = vsub.f32 %v1873, %v1921
        %v1970 = vsub.f32 %v1874, %v1923
        %v1971 = vsub.f32 %v1875, %v1925
        %v1972 = vsub.f32 %v1876, %v1927
        %v1973 = vsub.f32 %v1877, %v1929
        %v1974 = vsub.f32 %v1878, %v1931
        %v1975 = vsub.f32 %v1879, %v1933
        %v1976 = vsub.f32 %v1880, %v1935
        %v1977 = vsub.f32 %v1881, %v1937
        %v1978 = vsub.f32 %v1882, %v1939
        %v1979 = vsub.f32 %v1883, %v1941
        %v1980 = vsub.f32 %v1884, %v1943
        %v1981 = vsub.f32 %v1885, %v1945
        %v1982 = vsub.f32 %v1886, %v1947
        %v1983 = vsub.f32 %v1887, %v1949
        %v1984 = vsub.f32 %v1888, %v1951
        %v1985 = vsub.f32 %v1889, %v1953
        %v1986 = vmul.f32 %v1954, 1.442695
        %v1987 = vpow.pop %v1986
        %v1988 = vmul.f32 %v1955, 1.442695
        %v1989 = vpow.pop %v1988
        %v1990 = vmul.f32 %v1956, 1.442695
        %v1991 = vpow.pop %v1990
        %v1992 = vmul.f32 %v1957, 1.442695
        %v1993 = vpow.pop %v1992
        %v1994 = vmul.f32 %v1958, 1.442695
        %v1995 = vpow.pop %v1994
        %v1996 = vmul.f32 %v1959, 1.442695
        %v1997 = vpow.pop %v1996
        %v1998 = vmul.f32 %v1960, 1.442695
        %v1999 = vpow.pop %v1998
        %v2000 = vmul.f32 %v1961, 1.442695
        %v2001 = vpow.pop %v2000
        %v2002 = vmul.f32 %v1962, 1.442695
        %v2003 = vpow.pop %v2002
        %v2004 = vmul.f32 %v1963, 1.442695
        %v2005 = vpow.pop %v2004
        %v2006 = vmul.f32 %v1964, 1.442695
        %v2007 = vpow.pop %v2006
        %v2008 = vmul.f32 %v1965, 1.442695
        %v2009 = vpow.pop %v2008
        %v2010 = vmul.f32 %v1966, 1.442695
        %v2011 = vpow.pop %v2010
        %v2012 = vmul.f32 %v1967, 1.442695
        %v2013 = vpow.pop %v2012
        %v2014 = vmul.f32 %v1968, 1.442695
        %v2015 = vpow.pop %v2014
        %v2016 = vmul.f32 %v1969, 1.442695
        %v2017 = vpow.pop %v2016
        %v2018 = vmul.f32 %v1970, 1.442695
        %v2019 = vpow.pop %v2018
        %v2020 = vmul.f32 %v1971, 1.442695
        %v2021 = vpow.pop %v2020
        %v2022 = vmul.f32 %v1972, 1.442695
        %v2023 = vpow.pop %v2022
        %v2024 = vmul.f32 %v1973, 1.442695
        %v2025 = vpow.pop %v2024
        %v2026 = vmul.f32 %v1974, 1.442695
        %v2027 = vpow.pop %v2026
        %v2028 = vmul.f32 %v1975, 1.442695
        %v2029 = vpow.pop %v2028
        %v2030 = vmul.f32 %v1976, 1.442695
        %v2031 = vpow.pop %v2030
        %v2032 = vmul.f32 %v1977, 1.442695
        %v2033 = vpow.pop %v2032
        %v2034 = vmul.f32 %v1978, 1.442695
        %v2035 = vpow.pop %v2034
        %v2036 = vmul.f32 %v1979, 1.442695
        %v2037 = vpow.pop %v2036
        %v2038 = vmul.f32 %v1980, 1.442695
        %v2039 = vpow.pop %v2038
        %v2040 = vmul.f32 %v1981, 1.442695
        %v2041 = vpow.pop %v2040
        %v2042 = vmul.f32 %v1982, 1.442695
        %v2043 = vpow.pop %v2042
        %v2044 = vmul.f32 %v1983, 1.442695
        %v2045 = vpow.pop %v2044
        %v2046 = vmul.f32 %v1984, 1.442695
        %v2047 = vpow.pop %v2046
        %v2048 = vmul.f32 %v1985, 1.442695
        %v2049 = vpow.pop %v2048
        %2050 = vadd.xlane.f32.xlu0 %v1987
        %v2051 = vpop.xlane.xlu0 %2050
        %2052 = vadd.xlane.f32.xlu0 %v1989
        %v2053 = vpop.xlane.xlu0 %2052
        %2054 = vadd.xlane.f32.xlu0 %v1991
        %v2055 = vpop.xlane.xlu0 %2054
        %2056 = vadd.xlane.f32.xlu0 %v1993
        %v2057 = vpop.xlane.xlu0 %2056
        %2058 = vadd.xlane.f32.xlu0 %v1995
        %v2059 = vpop.xlane.xlu0 %2058
        %2060 = vadd.xlane.f32.xlu0 %v1997
        %v2061 = vpop.xlane.xlu0 %2060
        %2062 = vadd.xlane.f32.xlu0 %v1999
        %v2063 = vpop.xlane.xlu0 %2062
        %2064 = vadd.xlane.f32.xlu0 %v2001
        %v2065 = vpop.xlane.xlu0 %2064
        %2066 = vadd.xlane.f32.xlu0 %v2003
        %v2067 = vpop.xlane.xlu0 %2066
        %2068 = vadd.xlane.f32.xlu0 %v2005
        %v2069 = vpop.xlane.xlu0 %2068
        %2070 = vadd.xlane.f32.xlu0 %v2007
        %v2071 = vpop.xlane.xlu0 %2070
        %2072 = vadd.xlane.f32.xlu0 %v2009
        %v2073 = vpop.xlane.xlu0 %2072
        %2074 = vadd.xlane.f32.xlu0 %v2011
        %v2075 = vpop.xlane.xlu0 %2074
        %2076 = vadd.xlane.f32.xlu0 %v2013
        %v2077 = vpop.xlane.xlu0 %2076
        %2078 = vadd.xlane.f32.xlu0 %v2015
        %v2079 = vpop.xlane.xlu0 %2078
        %2080 = vadd.xlane.f32.xlu0 %v2017
        %v2081 = vpop.xlane.xlu0 %2080
        %2082 = vadd.xlane.f32.xlu0 %v2019
        %v2083 = vpop.xlane.xlu0 %2082
        %2084 = vadd.xlane.f32.xlu0 %v2021
        %v2085 = vpop.xlane.xlu0 %2084
        %2086 = vadd.xlane.f32.xlu0 %v2023
        %v2087 = vpop.xlane.xlu0 %2086
        %2088 = vadd.xlane.f32.xlu0 %v2025
        %v2089 = vpop.xlane.xlu0 %2088
        %2090 = vadd.xlane.f32.xlu0 %v2027
        %v2091 = vpop.xlane.xlu0 %2090
        %2092 = vadd.xlane.f32.xlu0 %v2029
        %v2093 = vpop.xlane.xlu0 %2092
        %2094 = vadd.xlane.f32.xlu0 %v2031
        %v2095 = vpop.xlane.xlu0 %2094
        %2096 = vadd.xlane.f32.xlu0 %v2033
        %v2097 = vpop.xlane.xlu0 %2096
        %2098 = vadd.xlane.f32.xlu0 %v2035
        %v2099 = vpop.xlane.xlu0 %2098
        %2100 = vadd.xlane.f32.xlu0 %v2037
        %v2101 = vpop.xlane.xlu0 %2100
        %2102 = vadd.xlane.f32.xlu0 %v2039
        %v2103 = vpop.xlane.xlu0 %2102
        %2104 = vadd.xlane.f32.xlu0 %v2041
        %v2105 = vpop.xlane.xlu0 %2104
        %2106 = vadd.xlane.f32.xlu0 %v2043
        %v2107 = vpop.xlane.xlu0 %2106
        %2108 = vadd.xlane.f32.xlu0 %v2045
        %v2109 = vpop.xlane.xlu0 %2108
        %2110 = vadd.xlane.f32.xlu0 %v2047
        %v2111 = vpop.xlane.xlu0 %2110
        %2112 = vadd.xlane.f32.xlu0 %v2049
        %v2113 = vpop.xlane.xlu0 %2112
        %v2114 = vpack.c.bf16 %v1989, %v1987
        %v2115 = vpack.c.bf16 %v1993, %v1991
        %v2116 = vpack.c.bf16 %v1997, %v1995
        %v2117 = vpack.c.bf16 %v2001, %v1999
        %v2118 = vpack.c.bf16 %v2005, %v2003
        %v2119 = vpack.c.bf16 %v2009, %v2007
        %v2120 = vpack.c.bf16 %v2013, %v2011
        %v2121 = vpack.c.bf16 %v2017, %v2015
        %v2122 = vpack.c.bf16 %v2021, %v2019
        %v2123 = vpack.c.bf16 %v2025, %v2023
        %v2124 = vpack.c.bf16 %v2029, %v2027
        %v2125 = vpack.c.bf16 %v2033, %v2031
        %v2126 = vpack.c.bf16 %v2037, %v2035
        %v2127 = vpack.c.bf16 %v2041, %v2039
        %v2128 = vpack.c.bf16 %v2045, %v2043
        %v2129 = vpack.c.bf16 %v2049, %v2047
        %2130 = vmatprep.subr.bf16.mxu0 0
        %2131 = vmatpush1.bf16.msra.mxu0 %v1549
        %2132 = vmatprep.subr.bf16.mxu0 0
        %2133 = vmatpush1.bf16.msra.mxu0 %v1550
        %2134 = vmatprep.subr.bf16.mxu0 0
        %2135 = vmatpush1.bf16.msra.mxu0 %v1551
        %2136 = vmatprep.subr.bf16.mxu0 0
        %2137 = vmatpush1.bf16.msra.mxu0 %v1552
        %2138 = vmatprep.subr.bf16.mxu0 0
        %2139 = vmatpush1.bf16.msra.mxu0 %v1553
        %2140 = vmatprep.subr.bf16.mxu0 0
        %2141 = vmatpush1.bf16.msra.mxu0 %v1554
        %2142 = vmatprep.subr.bf16.mxu0 0
        %2143 = vmatpush1.bf16.msra.mxu0 %v1555
        %2144 = vmatprep.subr.bf16.mxu0 0
        %2145 = vmatpush1.bf16.msra.mxu0 %v1556
        %2146 = vmatprep.subr.bf16.mxu0 0
        %2147 = vmatpush1.bf16.msra.mxu0 0
        %2148 = vmatprep.subr.bf16.mxu0 0
        %2149 = vmatpush1.bf16.msra.mxu0 0
        %2150 = vmatprep.subr.bf16.mxu0 0
        %2151 = vmatpush1.bf16.msra.mxu0 0
        %2152 = vmatprep.subr.bf16.mxu0 0
        %2153 = vmatpush1.bf16.msra.mxu0 0
        %2154 = vmatprep.subr.bf16.mxu0 0
        %2155 = vmatpush1.bf16.msra.mxu0 0
        %2156 = vmatprep.subr.bf16.mxu0 0
        %2157 = vmatpush1.bf16.msra.mxu0 0
        %2158 = vmatprep.subr.bf16.mxu0 0
        %2159 = vmatpush1.bf16.msra.mxu0 0
        %2160 = vmatprep.subr.bf16.mxu0 0
        %2161 = vmatpush1.bf16.msra.mxu0 0
        %2162 = vmatprep.mubr.bf16.mxu0 0
        %2163 = vmatmul.mubr.bf16.gmra.mrb[0].mxu0 %v2114
        %v2164 = vpop.f32.mrb[0].mxu0
        %v2165 = vadd.f32 0.0, %v2164
        %v2166 = vpop.f32.mrb[0].mxu0
        %v2167 = vpop.f32.mrb[0].mxu0
        %v2168 = vadd.f32 0.0, %v2167
        %v2169 = vpop.f32.mrb[0].mxu0
        %2170 = vmatprep.mubr.bf16.mxu0 0
        %2171 = vmatmul.mubr.bf16.gmra.mrb[0].mxu0 %v2115
        %v2172 = vpop.f32.mrb[0].mxu0
        %v2173 = vadd.f32 0.0, %v2172
        %v2174 = vpop.f32.mrb[0].mxu0
        %v2175 = vpop.f32.mrb[0].mxu0
        %v2176 = vadd.f32 0.0, %v2175
        %v2177 = vpop.f32.mrb[0].mxu0
        %2178 = vmatprep.mubr.bf16.mxu0 0
        %2179 = vmatmul.mubr.bf16.gmra.mrb[0].mxu0 %v2116
        %v2180 = vpop.f32.mrb[0].mxu0
        %v2181 = vadd.f32 0.0, %v2180
        %v2182 = vpop.f32.mrb[0].mxu0
        %v2183 = vpop.f32.mrb[0].mxu0
        %v2184 = vadd.f32 0.0, %v2183
        %v2185 = vpop.f32.mrb[0].mxu0
        %2186 = vmatprep.mubr.bf16.mxu0 0
        %2187 = vmatmul.mubr.bf16.gmra.mrb[0].mxu0 %v2117
        %v2188 = vpop.f32.mrb[0].mxu0
        %v2189 = vadd.f32 0.0, %v2188
        %v2190 = vpop.f32.mrb[0].mxu0
        %v2191 = vpop.f32.mrb[0].mxu0
        %v2192 = vadd.f32 0.0, %v2191
        %v2193 = vpop.f32.mrb[0].mxu0
        %2194 = vmatprep.mubr.bf16.mxu0 0
        %2195 = vmatmul.mubr.bf16.gmra.mrb[0].mxu0 %v2118
        %v2196 = vpop.f32.mrb[0].mxu0
        %v2197 = vadd.f32 0.0, %v2196
        %v2198 = vpop.f32.mrb[0].mxu0
        %v2199 = vpop.f32.mrb[0].mxu0
        %v2200 = vadd.f32 0.0, %v2199
        %v2201 = vpop.f32.mrb[0].mxu0
        %2202 = vmatprep.mubr.bf16.mxu0 0
        %2203 = vmatmul.mubr.bf16.gmra.mrb[0].mxu0 %v2119
        %v2204 = vpop.f32.mrb[0].mxu0
        %v2205 = vadd.f32 0.0, %v2204
        %v2206 = vpop.f32.mrb[0].mxu0
        %v2207 = vpop.f32.mrb[0].mxu0
        %v2208 = vadd.f32 0.0, %v2207
        %v2209 = vpop.f32.mrb[0].mxu0
        %2210 = vmatprep.mubr.bf16.mxu0 0
        %2211 = vmatmul.mubr.bf16.gmra.mrb[0].mxu0 %v2120
        %v2212 = vpop.f32.mrb[0].mxu0
        %v2213 = vadd.f32 0.0, %v2212
        %v2214 = vpop.f32.mrb[0].mxu0
        %v2215 = vpop.f32.mrb[0].mxu0
        %v2216 = vadd.f32 0.0, %v2215
        %v2217 = vpop.f32.mrb[0].mxu0
        %2218 = vmatprep.mubr.bf16.mxu0 0
        %2219 = vmatmul.mubr.bf16.gmra.mrb[0].mxu0 %v2121
        %v2220 = vpop.f32.mrb[0].mxu0
        %v2221 = vadd.f32 0.0, %v2220
        %v2222 = vpop.f32.mrb[0].mxu0
        %v2223 = vpop.f32.mrb[0].mxu0
        %v2224 = vadd.f32 0.0, %v2223
        %v2225 = vpop.f32.mrb[0].mxu0
        %2226 = vdwg.mxu0
        %2227 = vmatprep.subr.bf16.mxu0 0
        %2228 = vmatpush1.bf16.msra.mxu0 %v1557
        %2229 = vmatprep.subr.bf16.mxu0 0
        %2230 = vmatpush1.bf16.msra.mxu0 %v1558
        %2231 = vmatprep.subr.bf16.mxu0 0
        %2232 = vmatpush1.bf16.msra.mxu0 %v1559
        %2233 = vmatprep.subr.bf16.mxu0 0
        %2234 = vmatpush1.bf16.msra.mxu0 %v1560
        %2235 = vmatprep.subr.bf16.mxu0 0
        %2236 = vmatpush1.bf16.msra.mxu0 %v1561
        %2237 = vmatprep.subr.bf16.mxu0 0
        %2238 = vmatpush1.bf16.msra.mxu0 %v1562
        %2239 = vmatprep.subr.bf16.mxu0 0
        %2240 = vmatpush1.bf16.msra.mxu0 %v1563
        %2241 = vmatprep.subr.bf16.mxu0 0
        %2242 = vmatpush1.bf16.msra.mxu0 %v1564
        %2243 = vmatprep.subr.bf16.mxu0 0
        %2244 = vmatpush1.bf16.msra.mxu0 0
        %2245 = vmatprep.subr.bf16.mxu0 0
        %2246 = vmatpush1.bf16.msra.mxu0 0
        %2247 = vmatprep.subr.bf16.mxu0 0
        %2248 = vmatpush1.bf16.msra.mxu0 0
        %2249 = vmatprep.subr.bf16.mxu0 0
        %2250 = vmatpush1.bf16.msra.mxu0 0
        %2251 = vmatprep.subr.bf16.mxu0 0
        %2252 = vmatpush1.bf16.msra.mxu0 0
        %2253 = vmatprep.subr.bf16.mxu0 0
        %2254 = vmatpush1.bf16.msra.mxu0 0
        %2255 = vmatprep.subr.bf16.mxu0 0
        %2256 = vmatpush1.bf16.msra.mxu0 0
        %2257 = vmatprep.subr.bf16.mxu0 0
        %2258 = vmatpush1.bf16.msra.mxu0 0
        %2259 = vmatprep.mubr.bf16.mxu0 0
        %2260 = vmatmul.mubr.bf16.gmra.mrb[0].mxu0 %v2122
        %v2261 = vpop.f32.mrb[0].mxu0
        %v2262 = vadd.f32 0.0, %v2261
        %v2263 = vpop.f32.mrb[0].mxu0
        %v2264 = vpop.f32.mrb[0].mxu0
        %v2265 = vadd.f32 0.0, %v2264
        %v2266 = vpop.f32.mrb[0].mxu0
        %2267 = vmatprep.mubr.bf16.mxu0 0
        %2268 = vmatmul.mubr.bf16.gmra.mrb[0].mxu0 %v2123
        %v2269 = vpop.f32.mrb[0].mxu0
        %v2270 = vadd.f32 0.0, %v2269
        %v2271 = vpop.f32.mrb[0].mxu0
        %v2272 = vpop.f32.mrb[0].mxu0
        %v2273 = vadd.f32 0.0, %v2272
        %v2274 = vpop.f32.mrb[0].mxu0
        %2275 = vmatprep.mubr.bf16.mxu0 0
        %2276 = vmatmul.mubr.bf16.gmra.mrb[0].mxu0 %v2124
        %v2277 = vpop.f32.mrb[0].mxu0
        %v2278 = vadd.f32 0.0, %v2277
        %v2279 = vpop.f32.mrb[0].mxu0
        %v2280 = vpop.f32.mrb[0].mxu0
        %v2281 = vadd.f32 0.0, %v2280
        %v2282 = vpop.f32.mrb[0].mxu0
        %2283 = vmatprep.mubr.bf16.mxu0 0
        %2284 = vmatmul.mubr.bf16.gmra.mrb[0].mxu0 %v2125
        %v2285 = vpop.f32.mrb[0].mxu0
        %v2286 = vadd.f32 0.0, %v2285
        %v2287 = vpop.f32.mrb[0].mxu0
        %v2288 = vpop.f32.mrb[0].mxu0
        %v2289 = vadd.f32 0.0, %v2288
        %v2290 = vpop.f32.mrb[0].mxu0
        %2291 = vmatprep.mubr.bf16.mxu0 0
        %2292 = vmatmul.mubr.bf16.gmra.mrb[0].mxu0 %v2126
        %v2293 = vpop.f32.mrb[0].mxu0
        %v2294 = vadd.f32 0.0, %v2293
        %v2295 = vpop.f32.mrb[0].mxu0
        %v2296 = vpop.f32.mrb[0].mxu0
        %v2297 = vadd.f32 0.0, %v2296
        %v2298 = vpop.f32.mrb[0].mxu0
        %2299 = vmatprep.mubr.bf16.mxu0 0
        %2300 = vmatmul.mubr.bf16.gmra.mrb[0].mxu0 %v2127
        %v2301 = vpop.f32.mrb[0].mxu0
        %v2302 = vadd.f32 0.0, %v2301
        %v2303 = vpop.f32.mrb[0].mxu0
        %v2304 = vpop.f32.mrb[0].mxu0
        %v2305 = vadd.f32 0.0, %v2304
        %v2306 = vpop.f32.mrb[0].mxu0
        %2307 = vmatprep.mubr.bf16.mxu0 0
        %2308 = vmatmul.mubr.bf16.gmra.mrb[0].mxu0 %v2128
        %v2309 = vpop.f32.mrb[0].mxu0
        %v2310 = vadd.f32 0.0, %v2309
        %v2311 = vpop.f32.mrb[0].mxu0
        %v2312 = vpop.f32.mrb[0].mxu0
        %v2313 = vadd.f32 0.0, %v2312
        %v2314 = vpop.f32.mrb[0].mxu0
        %2315 = vmatprep.mubr.bf16.mxu0 0
        %2316 = vmatmul.mubr.bf16.gmra.mrb[0].mxu0 %v2129
        %v2317 = vpop.f32.mrb[0].mxu0
        %v2318 = vadd.f32 0.0, %v2317
        %v2319 = vpop.f32.mrb[0].mxu0
        %v2320 = vpop.f32.mrb[0].mxu0
        %v2321 = vadd.f32 0.0, %v2320
        %v2322 = vpop.f32.mrb[0].mxu0
        %2323 = vdwg.mxu0
        %v2324 = vrcp.pop %v2051
        %v2325 = vrcp.pop %v2053
        %v2326 = vrcp.pop %v2055
        %v2327 = vrcp.pop %v2057
        %v2328 = vrcp.pop %v2059
        %v2329 = vrcp.pop %v2061
        %v2330 = vrcp.pop %v2063
        %v2331 = vrcp.pop %v2065
        %v2332 = vrcp.pop %v2067
        %v2333 = vrcp.pop %v2069
        %v2334 = vrcp.pop %v2071
        %v2335 = vrcp.pop %v2073
        %v2336 = vrcp.pop %v2075
        %v2337 = vrcp.pop %v2077
        %v2338 = vrcp.pop %v2079
        %v2339 = vrcp.pop %v2081
        %v2340 = vrcp.pop %v2083
        %v2341 = vrcp.pop %v2085
        %v2342 = vrcp.pop %v2087
        %v2343 = vrcp.pop %v2089
        %v2344 = vrcp.pop %v2091
        %v2345 = vrcp.pop %v2093
        %v2346 = vrcp.pop %v2095
        %v2347 = vrcp.pop %v2097
        %v2348 = vrcp.pop %v2099
        %v2349 = vrcp.pop %v2101
        %v2350 = vrcp.pop %v2103
        %v2351 = vrcp.pop %v2105
        %v2352 = vrcp.pop %v2107
        %v2353 = vrcp.pop %v2109
        %v2354 = vrcp.pop %v2111
        %v2355 = vrcp.pop %v2113
        %v2356 = vmul.f32 %v2165, %v2324
        %v2357 = vmul.f32 %v2168, %v2325
        %v2358 = vmul.f32 %v2173, %v2326
        %v2359 = vmul.f32 %v2176, %v2327
        %v2360 = vmul.f32 %v2181, %v2328
        %v2361 = vmul.f32 %v2184, %v2329
        %v2362 = vmul.f32 %v2189, %v2330
        %v2363 = vmul.f32 %v2192, %v2331
        %v2364 = vmul.f32 %v2197, %v2332
        %v2365 = vmul.f32 %v2200, %v2333
        %v2366 = vmul.f32 %v2205, %v2334
        %v2367 = vmul.f32 %v2208, %v2335
        %v2368 = vmul.f32 %v2213, %v2336
        %v2369 = vmul.f32 %v2216, %v2337
        %v2370 = vmul.f32 %v2221, %v2338
        %v2371 = vmul.f32 %v2224, %v2339
        %v2372 = vmul.f32 %v2262, %v2340
        %v2373 = vmul.f32 %v2265, %v2341
        %v2374 = vmul.f32 %v2270, %v2342
        %v2375 = vmul.f32 %v2273, %v2343
        %v2376 = vmul.f32 %v2278, %v2344
        %v2377 = vmul.f32 %v2281, %v2345
        %v2378 = vmul.f32 %v2286, %v2346
        %v2379 = vmul.f32 %v2289, %v2347
        %v2380 = vmul.f32 %v2294, %v2348
        %v2381 = vmul.f32 %v2297, %v2349
        %v2382 = vmul.f32 %v2302, %v2350
        %v2383 = vmul.f32 %v2305, %v2351
        %v2384 = vmul.f32 %v2310, %v2352
        %v2385 = vmul.f32 %v2313, %v2353
        %v2386 = vmul.f32 %v2318, %v2354
        %v2387 = vmul.f32 %v2321, %v2355
        %vm2388 = vcmask 523264
        %2389 = vst.msk [vmem:[%s182] sm:$0xff] %vm2388, %v2356
        %2390 = vst.msk [vmem:[%s182 + $0x8] sm:$0xff] %vm2388, %v2357
        %2391 = vst.msk [vmem:[%s182 + $0x10] sm:$0xff] %vm2388, %v2358
        %2392 = vst.msk [vmem:[%s182 + $0x18] sm:$0xff] %vm2388, %v2359
        %2393 = vst.msk [vmem:[%s182 + $0x20] sm:$0xff] %vm2388, %v2360
        %2394 = vst.msk [vmem:[%s182 + $0x28] sm:$0xff] %vm2388, %v2361
        %2395 = vst.msk [vmem:[%s182 + $0x30] sm:$0xff] %vm2388, %v2362
        %2396 = vst.msk [vmem:[%s182 + $0x38] sm:$0xff] %vm2388, %v2363
        %2397 = vst.msk [vmem:[%s182 + $0x40] sm:$0xff] %vm2388, %v2364
        %2398 = vst.msk [vmem:[%s182 + $0x48] sm:$0xff] %vm2388, %v2365
        %2399 = vst.msk [vmem:[%s182 + $0x50] sm:$0xff] %vm2388, %v2366
        %2400 = vst.msk [vmem:[%s182 + $0x58] sm:$0xff] %vm2388, %v2367
        %2401 = vst.msk [vmem:[%s182 + $0x60] sm:$0xff] %vm2388, %v2368
        %2402 = vst.msk [vmem:[%s182 + $0x68] sm:$0xff] %vm2388, %v2369
        %2403 = vst.msk [vmem:[%s182 + $0x70] sm:$0xff] %vm2388, %v2370
        %2404 = vst.msk [vmem:[%s182 + $0x78] sm:$0xff] %vm2388, %v2371
        %2405 = vst.msk [vmem:[%s182 + $0x80] sm:$0xff] %vm2388, %v2372
        %2406 = vst.msk [vmem:[%s182 + $0x88] sm:$0xff] %vm2388, %v2373
        %2407 = vst.msk [vmem:[%s182 + $0x90] sm:$0xff] %vm2388, %v2374
        %2408 = vst.msk [vmem:[%s182 + $0x98] sm:$0xff] %vm2388, %v2375
        %2409 = vst.msk [vmem:[%s182 + $0xa0] sm:$0xff] %vm2388, %v2376
        %2410 = vst.msk [vmem:[%s182 + $0xa8] sm:$0xff] %vm2388, %v2377
        %2411 = vst.msk [vmem:[%s182 + $0xb0] sm:$0xff] %vm2388, %v2378
        %2412 = vst.msk [vmem:[%s182 + $0xb8] sm:$0xff] %vm2388, %v2379
        %2413 = vst.msk [vmem:[%s182 + $0xc0] sm:$0xff] %vm2388, %v2380
        %2414 = vst.msk [vmem:[%s182 + $0xc8] sm:$0xff] %vm2388, %v2381
        %2415 = vst.msk [vmem:[%s182 + $0xd0] sm:$0xff] %vm2388, %v2382
        %2416 = vst.msk [vmem:[%s182 + $0xd8] sm:$0xff] %vm2388, %v2383
        %2417 = vst.msk [vmem:[%s182 + $0xe0] sm:$0xff] %vm2388, %v2384
        %2418 = vst.msk [vmem:[%s182 + $0xe8] sm:$0xff] %vm2388, %v2385
        %2419 = vst.msk [vmem:[%s182 + $0xf0] sm:$0xff] %vm2388, %v2386
        %2420 = vst.msk [vmem:[%s182 + $0xf8] sm:$0xff] %vm2388, %v2387
        %s2421 = smul.u32 2, %s17
        %p2422 = scmp.lt.s32.totalorder %s2421, 3
        %s2423 = scalar_select %p2422, %s2421, 3
        %s2424 = smul.addr %s2423, 16
        %s2425 = smul.addr %s2424, 8
        %s2426 = scalar_lea.vmem %s2, %s2425
        // Predicated region
        $region37: #{tpu_custom_call.1} parent=27 // pred_check
          %p2427 = pneg %p82
        $region38: #{tpu_custom_call.1} parent=27 // pred_check_branch
          %2429 = sbr.rel (%p2427) target = $region40
        $region39: #{tpu_custom_call.1} parent=27 // pred_region
          %s2430 = smul.u32 2, %s17
        $region40: #{tpu_custom_call.1} parent=27 // pred_fallthru
          _
      $region28: #{tpu_custom_call.1} parent=5 // pred_fallthru
        _
      %p2431 = scmp.le.s32.totalorder 2, %s12
      // Predicated region
      $region41: #{tpu_custom_call.1} parent=5 // pred_check
        %p2432 = pneg %p2431
      $region42: #{tpu_custom_call.1} parent=5 // pred_check_branch
        %2434 = sbr.rel (%p2432) target = $region44
      $region43: #{tpu_custom_call.1} parent=5 // pred_region
        %s2435 = ssub.s32 %s12, 2
        // Predicated region
        $region45: #{tpu_custom_call.1} parent=43 // pred_check
          %p2436 = pneg %p88
        $region46: #{tpu_custom_call.1} parent=43 // pred_check_branch
          %2438 = sbr.rel (%p2436) target = $region48
        $region47: #{tpu_custom_call.1} parent=43 // pred_region
          %s2439 = smul.u32 2, %s18
          %p2440 = scmp.lt.s32.totalorder %s2439, 3
          %s2441 = scalar_select %p2440, %s2439, 3
          %s2442 = smul.addr %s2441, 16
          %s2443 = smul.addr %s2442, 8
          %s2444 = scalar_lea.vmem %s2, %s2443
        $region48: #{tpu_custom_call.1} parent=43 // pred_fallthru
          _
      $region44: #{tpu_custom_call.1} parent=5 // pred_fallthru
        _
    $region6: #{tpu_custom_call.1} parent=1 // loop_footer
      %s16 = sadd.s32 1, %s12
    $region7: #{tpu_custom_call.1} parent=1 // loop_footer_branch
      %11 = sbr.rel target = $region3
    $region8: #{tpu_custom_call.1} parent=1 // loop_exit
      _
    %2445 = vsyncpa [#allocation3], 1
    %s2446 = scalar_lea.sflag [#allocation3], 1
    %2447 = vsyncpa %s2446, 1
    %2448 = vsyncpa [#allocation5], 1

</llo_original>
